<compile_context>
chip_gen: v7x
topology: tpu7x:2x2x1
jax: 0.10.0
libtpu: 0.0.40
codegen_flags: <defaults>
</compile_context>

<pallas_src>
import functools

import jax
import jax.numpy as jnp
from jax.experimental import pallas as pl
from jax.experimental.pallas import tpu as pltpu

LAYER1 = 400
LAYER2 = 300
_LANE = 128
_SUBLANE = 8
_MAX_TM = 512


def _round_up(x, m):
    return ((x + m - 1) // m) * m


L1P = _round_up(LAYER1, _LANE)          # 512
L2P = _round_up(LAYER2, _LANE)          # 384
_B_TOTAL = 2 * L1P + 2 * L2P + _LANE    # 1920 packed-bias width


# ---------------------------------------------------------------------------
# Kernel
# ---------------------------------------------------------------------------
def _critic_kernel(sa_ref, w1f_ref, w25_ref, wh_ref, b_ref, q_ref, *, l1p, l2p):
    sa = sa_ref[...]                                            # (tm, in_pad) bf16

    # Fused layer 1 for BOTH critics: one MXU pass (tm, in_pad) @ (in_pad, 2*l1p).
    h = jnp.dot(sa, w1f_ref[...], preferred_element_type=jnp.float32)
    h = jnp.maximum(h + b_ref[:, 0:2 * l1p], 0.0).astype(jnp.bfloat16)

    # Layer 2 per critic (different inputs, so two matmuls). Slices are 128-aligned.
    g1 = jnp.dot(h[:, :l1p], w25_ref[0], preferred_element_type=jnp.float32)
    g1 = jnp.maximum(g1 + b_ref[:, 2 * l1p:2 * l1p + l2p], 0.0).astype(jnp.bfloat16)
    g2 = jnp.dot(h[:, l1p:], w25_ref[1], preferred_element_type=jnp.float32)
    g2 = jnp.maximum(g2 + b_ref[:, 2 * l1p + l2p:2 * l1p + 2 * l2p], 0.0).astype(jnp.bfloat16)

    # Lane-dense head: two (tm, l2p) @ (l2p, 128) matmuls accumulated in f32.
    # q1 lands in lane 0, q2 in lane 1, remaining lanes are exactly zero.
    q = jnp.dot(g1, wh_ref[0], preferred_element_type=jnp.float32)
    q = q + jnp.dot(g2, wh_ref[1], preferred_element_type=jnp.float32)
    q = q + b_ref[:, 2 * l1p + 2 * l2p:]
    q_ref[...] = q.astype(q_ref.dtype)                          # unmasked (tm, 128) store


# ---------------------------------------------------------------------------
# Parameter preparation (fuse + pad + bf16 cast) — do this ONCE per weight update.
# ---------------------------------------------------------------------------
def prepare_params(params):
    in_dim = params["w1"].shape[0]
    in_pad = _round_up(in_dim, _LANE)

    def pad_to(w, rows, cols):
        return jnp.pad(w, ((0, rows - w.shape[0]), (0, cols - w.shape[1])))

    # Fused layer-1 weight: (in_pad, 2*L1P). Padded contraction rows are zero.
    w1f = jnp.concatenate([pad_to(params["w1"], in_pad, L1P),
                           pad_to(params["w4"], in_pad, L1P)], axis=1)
    # Stacked layer-2 weights: (2, L1P, L2P).
    w25 = jnp.stack([pad_to(params["w2"], L1P, L2P),
                     pad_to(params["w5"], L1P, L2P)], axis=0)
    # Lane-dense stacked head: (2, L2P, 128). w3 -> slab 0 / lane 0, w6 -> slab 1 / lane 1.
    wh0 = pad_to(params["w3"], L2P, _LANE)
    wh1 = jnp.pad(pad_to(params["w6"], L2P, 1), ((0, 0), (1, _LANE - 2)))
    wh = jnp.stack([wh0, wh1], axis=0)

    # Packed biases (f32): [b1 | b4 | b2 | b5 | b3 b6 0...(128-lane slot)] -> (1, 1920).
    def pad_b(b, n):
        return jnp.pad(b, ((0, 0), (0, n - b.shape[1])))

    b_head = jnp.concatenate([params["b3"], params["b6"],
                              jnp.zeros((1, _LANE - 2), jnp.float32)], axis=1)
    b_all = jnp.concatenate([
        pad_b(params["b1"], L1P), pad_b(params["b4"], L1P),
        pad_b(params["b2"], L2P), pad_b(params["b5"], L2P),
        b_head], axis=1)

    return {"w1f": w1f.astype(jnp.bfloat16),
            "w25": w25.astype(jnp.bfloat16),
            "wh": wh.astype(jnp.bfloat16),
            "b": b_all.astype(jnp.float32)}


# ---------------------------------------------------------------------------
# Forward wrapper
# ---------------------------------------------------------------------------
def critic_network_forward(state, action, prep):
    """Pallas equivalent of Critic_Network.forward(state, action) -> (q1, q2)."""
    in_pad = prep["w1f"].shape[0]

    sa = jnp.concatenate([state.astype(jnp.float32),
                          action.astype(jnp.float32)], axis=1)
    batch, in_dim = sa.shape
    # Pad contraction dim to a 128-lane multiple and cast once in the wrapper.
    sa = jnp.pad(sa, ((0, 0), (0, in_pad - in_dim))).astype(jnp.bfloat16)

    # Batch tile selection: sublane-aligned, capped at 512, split so padding stays small
    # and so larger batches give >=2 grid blocks (megacore sharding on v7x).
    rows = _round_up(max(batch, 1), _SUBLANE)
    if rows <= _MAX_TM:
        num_tiles = 2 if rows >= 2 * _SUBLANE else 1
    else:
        num_tiles = pl.cdiv(rows, _MAX_TM)
    tm = _round_up(pl.cdiv(rows, num_tiles), _SUBLANE)
    padded_batch = tm * num_tiles
    if padded_batch != batch:
        sa = jnp.pad(sa, ((0, padded_batch - batch), (0, 0)))

    kernel = functools.partial(_critic_kernel, l1p=L1P, l2p=L2P)

    q = pl.pallas_call(
        kernel,
        out_shape=jax.ShapeDtypeStruct((padded_batch, _LANE), jnp.float32),
        grid_spec=pltpu.PrefetchScalarGridSpec(
            num_scalar_prefetch=0,
            grid=(num_tiles,),
            in_specs=[
                pl.BlockSpec((tm, in_pad), lambda i: (i, 0)),        # SA rows (pipelined, bf16)
                pl.BlockSpec((in_pad, 2 * L1P), lambda i: (0, 0)),   # fused layer-1 W (resident)
                pl.BlockSpec((2, L1P, L2P), lambda i: (0, 0, 0)),    # stacked layer-2 W (resident)
                pl.BlockSpec((2, L2P, _LANE), lambda i: (0, 0, 0)),  # lane-dense head W (resident)
                pl.BlockSpec((1, _B_TOTAL), lambda i: (0, 0)),       # packed biases (resident)
            ],
            out_specs=pl.BlockSpec((tm, _LANE), lambda i: (i, 0)),   # lane-dense output
        ),
        compiler_params=pltpu.CompilerParams(
            dimension_semantics=("parallel",)),
    )(sa, prep["w1f"], prep["w25"], prep["wh"], prep["b"])

    q = q[:batch, :2]
    return q[:, 0:1], q[:, 1:2]


# ---------------------------------------------------------------------------
# Synthetic init + references
# ---------------------------------------------------------------------------
def init_params(key, state_dim, critic_action_dim, l1, l2):
    """Deterministic synthetic init (PyTorch-Linear-like uniform fan-in bounds).

    Weights are stored transposed vs. PyTorch, i.e. (in_features, out_features)."""
    in_dim = state_dim + critic_action_dim
    layout = [
        ("w1", (in_dim, l1), in_dim), ("b1", (1, l1), in_dim),
        ("w2", (l1, l2), l1),         ("b2", (1, l2), l1),
        ("w3", (l2, 1), l2),          ("b3", (1, 1), l2),
        ("w4", (in_dim, l1), in_dim), ("b4", (1, l1), in_dim),
        ("w5", (l1, l2), l1),         ("b5", (1, l2), l1),
        ("w6", (l2, 1), l2),          ("b6", (1, 1), l2),
    ]
    params = {}
    for name, shape, fan_in in layout:
        key, sub = jax.random.split(key)
        bound = float(fan_in) ** -0.5
        params[name] = jax.random.uniform(sub, shape, jnp.float32, -bound, bound)
    return params


def _reference_forward_f32(state, action, p):
    """Pure f32 reference matching the original torch module."""
    sa = jnp.concatenate([state, action], axis=1)

    def mlp(wa, ba, wb, bb, wc, bc):
        h = jnp.maximum(sa @ wa + ba, 0.0)
        h = jnp.maximum(h @ wb + bb, 0.0)
        return h @ wc + bc

    return (mlp(p["w1"], p["b1"], p["w2"], p["b2"], p["w3"], p["b3"]),
            mlp(p["w4"], p["b4"], p["w5"], p["b5"], p["w6"], p["b6"]))


def _reference_forward_prepared(state, action, prep):
    """Plain-JAX model of the exact bf16-weight / f32-accumulate math the kernel does."""
    in_pad = prep["w1f"].shape[0]
    sa = jnp.concatenate([state, action], axis=1).astype(jnp.float32)
    sa = jnp.pad(sa, ((0, 0), (0, in_pad - sa.shape[1]))).astype(jnp.bfloat16)
    b = prep["b"]
    h = jnp.dot(sa, prep["w1f"], preferred_element_type=jnp.float32) + b[:, :2 * L1P]
    h = jnp.maximum(h, 0.0).astype(jnp.bfloat16)
    g1 = jnp.dot(h[:, :L1P], prep["w25"][0], preferred_element_type=jnp.float32)
    g1 = jnp.maximum(g1 + b[:, 2 * L1P:2 * L1P + L2P], 0.0).astype(jnp.bfloat16)
    g2 = jnp.dot(h[:, L1P:], prep["w25"][1], preferred_element_type=jnp.float32)
    g2 = jnp.maximum(g2 + b[:, 2 * L1P + L2P:2 * L1P + 2 * L2P], 0.0).astype(jnp.bfloat16)
    q = (jnp.dot(g1, prep["wh"][0], preferred_element_type=jnp.float32)
         + jnp.dot(g2, prep["wh"][1], preferred_element_type=jnp.float32)
         + b[:, 2 * L1P + 2 * L2P:])
    return q[:, 0:1], q[:, 1:2]


# ---------------------------------------------------------------------------
if __name__ == "__main__":
    state_dim = 37            # site-observation vector (small synthetic choice)
    critic_action_dim = 12    # (NumCore+NumAcce+NumCloud) * NumAcce (synthetic)

    key = jax.random.PRNGKey(0)
    k_state, k_action, k_params = jax.random.split(key, 3)

    params = init_params(k_params, state_dim, critic_action_dim, LAYER1, LAYER2)
    prep = prepare_params(params)

    for batch in (4, 20):     # single-tile path and 2-tile (padded) path
        ks, ka = jax.random.split(jax.random.fold_in(k_state, batch))
        state = jax.random.normal(ks, (batch, state_dim), dtype=jnp.float32)
        action = jax.random.uniform(ka, (batch, critic_action_dim),
                                    jnp.float32, -1.0, 1.0)

        q1, q2 = critic_network_forward(state, action, prep)
        q1 = jax.block_until_ready(q1)
        q2 = jax.block_until_ready(q2)
        assert q1.shape == (batch, 1) and q2.shape == (batch, 1)

        # Strict check against a plain-JAX model of the same bf16-weight math.
        q1e, q2e = _reference_forward_prepared(state, action, prep)
        assert jnp.allclose(q1, q1e, atol=2e-3, rtol=2e-3)
        assert jnp.allclose(q2, q2e, atol=2e-3, rtol=2e-3)

        # Loose check against the original full-f32 torch semantics (bf16 weights only).
        q1f, q2f = _reference_forward_f32(state, action, params)
        assert jnp.allclose(q1, q1f, atol=5e-2, rtol=5e-2)
        assert jnp.allclose(q2, q2f, atol=5e-2, rtol=5e-2)

    print("KERNEL_OK")
</pallas_src>

<mosaic_0001>
module attributes {stable_mosaic.version = 11 : i64} {
  func.func @_critic_kernel(%arg0: i32, %arg1: memref<8x128xbf16, #tpu.memory_space<vmem>>, %arg2: memref<128x1024xbf16, #tpu.memory_space<vmem>>, %arg3: memref<2x512x384xbf16, #tpu.memory_space<vmem>>, %arg4: memref<2x384x128xbf16, #tpu.memory_space<vmem>>, %arg5: memref<1x1920xf32, #tpu.memory_space<vmem>>, %arg6: memref<8x128xf32, #tpu.memory_space<vmem>>) attributes {dimension_semantics = [#tpu.dimension_semantics<parallel>], iteration_bounds = array<i64: 1>, scalar_prefetch = 0 : i64, scratch_operands = 0 : i64, tpu.core_type = #tpu.core_type<tc>, window_params = [{transform_indices = @transform_0, window_bounds = array<i64: 8, 128>}, {pipeline_mode = #tpu.pipeline_mode<synchronous>, transform_indices = @transform_1, window_bounds = array<i64: 128, 1024>}, {pipeline_mode = #tpu.pipeline_mode<synchronous>, transform_indices = @transform_2, window_bounds = array<i64: 2, 512, 384>}, {pipeline_mode = #tpu.pipeline_mode<synchronous>, transform_indices = @transform_3, window_bounds = array<i64: 2, 384, 128>}, {pipeline_mode = #tpu.pipeline_mode<synchronous>, transform_indices = @transform_4, window_bounds = array<i64: 1, 1920>}, {transform_indices = @transform_5, window_bounds = array<i64: 8, 128>}]} {
    %c0 = arith.constant 0 : index
    %c0_0 = arith.constant 0 : index
    %0 = vector.load %arg1[%c0, %c0_0] : memref<8x128xbf16, #tpu.memory_space<vmem>>, vector<8x128xbf16>
    %c0_1 = arith.constant 0 : index
    %c0_2 = arith.constant 0 : index
    %1 = vector.load %arg2[%c0_1, %c0_2] : memref<128x1024xbf16, #tpu.memory_space<vmem>>, vector<128x1024xbf16>
    %cst = arith.constant dense<0.000000e+00> : vector<8x1024xf32>
    %2 = tpu.matmul %0, %1, %cst {dimension_numbers = #tpu.dot_dimension_numbers<[1], [0], [0], [1], [0, 0, 1, 1], [], []>} : vector<8x128xbf16>, vector<128x1024xbf16>, vector<8x1024xf32> -> vector<8x1024xf32>
    %c0_3 = arith.constant 0 : index
    %c0_4 = arith.constant 0 : index
    %3 = vector.load %arg5[%c0_3, %c0_4] : memref<1x1920xf32, #tpu.memory_space<vmem>>, vector<1x1024xf32>
    %4 = vector.broadcast %3 : vector<1x1024xf32> to vector<8x1024xf32>
    %5 = arith.addf %2, %4 : vector<8x1024xf32>
    %cst_5 = arith.constant 0.000000e+00 : f32
    %6 = vector.broadcast %cst_5 : f32 to vector<8x1024xf32>
    %7 = arith.maximumf %5, %6 : vector<8x1024xf32>
    %8 = arith.truncf %7 : vector<8x1024xf32> to vector<8x1024xbf16>
    %9 = vector.extract_strided_slice %8 {offsets = [0, 0], sizes = [8, 512], strides = [1, 1]} : vector<8x1024xbf16> to vector<8x512xbf16>
    %c0_6 = arith.constant 0 : index
    %c0_7 = arith.constant 0 : index
    %c0_8 = arith.constant 0 : index
    %10 = vector.load %arg3[%c0_6, %c0_7, %c0_8] : memref<2x512x384xbf16, #tpu.memory_space<vmem>>, vector<1x512x384xbf16>
    %11 = vector.shape_cast %10 : vector<1x512x384xbf16> to vector<512x384xbf16>
    %cst_9 = arith.constant dense<0.000000e+00> : vector<8x384xf32>
    %12 = tpu.matmul %9, %11, %cst_9 {dimension_numbers = #tpu.dot_dimension_numbers<[1], [0], [0], [1], [0, 0, 1, 1], [], []>} : vector<8x512xbf16>, vector<512x384xbf16>, vector<8x384xf32> -> vector<8x384xf32>
    %c0_10 = arith.constant 0 : index
    %c1024 = arith.constant 1024 : index
    %13 = vector.load %arg5[%c0_10, %c1024] : memref<1x1920xf32, #tpu.memory_space<vmem>>, vector<1x384xf32>
    %14 = vector.broadcast %13 : vector<1x384xf32> to vector<8x384xf32>
    %15 = arith.addf %12, %14 : vector<8x384xf32>
    %cst_11 = arith.constant 0.000000e+00 : f32
    %16 = vector.broadcast %cst_11 : f32 to vector<8x384xf32>
    %17 = arith.maximumf %15, %16 : vector<8x384xf32>
    %18 = arith.truncf %17 : vector<8x384xf32> to vector<8x384xbf16>
    %19 = vector.extract_strided_slice %8 {offsets = [0, 512], sizes = [8, 512], strides = [1, 1]} : vector<8x1024xbf16> to vector<8x512xbf16>
    %c1 = arith.constant 1 : index
    %c0_12 = arith.constant 0 : index
    %c0_13 = arith.constant 0 : index
    %20 = vector.load %arg3[%c1, %c0_12, %c0_13] : memref<2x512x384xbf16, #tpu.memory_space<vmem>>, vector<1x512x384xbf16>
    %21 = vector.shape_cast %20 : vector<1x512x384xbf16> to vector<512x384xbf16>
    %cst_14 = arith.constant dense<0.000000e+00> : vector<8x384xf32>
    %22 = tpu.matmul %19, %21, %cst_14 {dimension_numbers = #tpu.dot_dimension_numbers<[1], [0], [0], [1], [0, 0, 1, 1], [], []>} : vector<8x512xbf16>, vector<512x384xbf16>, vector<8x384xf32> -> vector<8x384xf32>
    %c0_15 = arith.constant 0 : index
    %c1408 = arith.constant 1408 : index
    %23 = vector.load %arg5[%c0_15, %c1408] : memref<1x1920xf32, #tpu.memory_space<vmem>>, vector<1x384xf32>
    %24 = vector.broadcast %23 : vector<1x384xf32> to vector<8x384xf32>
    %25 = arith.addf %22, %24 : vector<8x384xf32>
    %cst_16 = arith.constant 0.000000e+00 : f32
    %26 = vector.broadcast %cst_16 : f32 to vector<8x384xf32>
    %27 = arith.maximumf %25, %26 : vector<8x384xf32>
    %28 = arith.truncf %27 : vector<8x384xf32> to vector<8x384xbf16>
    %c0_17 = arith.constant 0 : index
    %c0_18 = arith.constant 0 : index
    %c0_19 = arith.constant 0 : index
    %29 = vector.load %arg4[%c0_17, %c0_18, %c0_19] : memref<2x384x128xbf16, #tpu.memory_space<vmem>>, vector<1x384x128xbf16>
    %30 = vector.shape_cast %29 : vector<1x384x128xbf16> to vector<384x128xbf16>
    %cst_20 = arith.constant dense<0.000000e+00> : vector<8x128xf32>
    %31 = tpu.matmul %18, %30, %cst_20 {dimension_numbers = #tpu.dot_dimension_numbers<[1], [0], [0], [1], [0, 0, 1, 1], [], []>} : vector<8x384xbf16>, vector<384x128xbf16>, vector<8x128xf32> -> vector<8x128xf32>
    %c1_21 = arith.constant 1 : index
    %c0_22 = arith.constant 0 : index
    %c0_23 = arith.constant 0 : index
    %32 = vector.load %arg4[%c1_21, %c0_22, %c0_23] : memref<2x384x128xbf16, #tpu.memory_space<vmem>>, vector<1x384x128xbf16>
    %33 = vector.shape_cast %32 : vector<1x384x128xbf16> to vector<384x128xbf16>
    %cst_24 = arith.constant dense<0.000000e+00> : vector<8x128xf32>
    %34 = tpu.matmul %28, %33, %cst_24 {dimension_numbers = #tpu.dot_dimension_numbers<[1], [0], [0], [1], [0, 0, 1, 1], [], []>} : vector<8x384xbf16>, vector<384x128xbf16>, vector<8x128xf32> -> vector<8x128xf32>
    %35 = arith.addf %31, %34 : vector<8x128xf32>
    %c0_25 = arith.constant 0 : index
    %c1792 = arith.constant 1792 : index
    %36 = vector.load %arg5[%c0_25, %c1792] : memref<1x1920xf32, #tpu.memory_space<vmem>>, vector<1x128xf32>
    %37 = vector.broadcast %36 : vector<1x128xf32> to vector<8x128xf32>
    %38 = arith.addf %35, %37 : vector<8x128xf32>
    %c0_26 = arith.constant 0 : index
    %c0_27 = arith.constant 0 : index
    %39 = vector.load %arg6[%c0_26, %c0_27] : memref<8x128xf32, #tpu.memory_space<vmem>>, vector<8x128xf32>
    tpu.vector_store %arg6[%c0_26, %c0_27], %38 {strides = array<i32>} : memref<8x128xf32, #tpu.memory_space<vmem>>, vector<8x128xf32>,
    return
  }
  func.func @transform_0(%arg0: i32) -> (i32, i32) {
    %c0_i32 = arith.constant 0 : i32
    %c0_i32_0 = arith.constant 0 : i32
    return %arg0, %c0_i32 : i32, i32
  }
  func.func @transform_1(%arg0: i32) -> (i32, i32) {
    %c0_i32 = arith.constant 0 : i32
    %c0_i32_0 = arith.constant 0 : i32
    %c0_i32_1 = arith.constant 0 : i32
    return %c0_i32, %c0_i32_0 : i32, i32
  }
  func.func @transform_2(%arg0: i32) -> (i32, i32, i32) {
    %c0_i32 = arith.constant 0 : i32
    %c0_i32_0 = arith.constant 0 : i32
    %c0_i32_1 = arith.constant 0 : i32
    %c0_i32_2 = arith.constant 0 : i32
    return %c0_i32, %c0_i32_0, %c0_i32_1 : i32, i32, i32
  }
  func.func @transform_3(%arg0: i32) -> (i32, i32, i32) {
    %c0_i32 = arith.constant 0 : i32
    %c0_i32_0 = arith.constant 0 : i32
    %c0_i32_1 = arith.constant 0 : i32
    %c0_i32_2 = arith.constant 0 : i32
    return %c0_i32, %c0_i32_0, %c0_i32_1 : i32, i32, i32
  }
  func.func @transform_4(%arg0: i32) -> (i32, i32) {
    %c0_i32 = arith.constant 0 : i32
    %c0_i32_0 = arith.constant 0 : i32
    %c0_i32_1 = arith.constant 0 : i32
    return %c0_i32, %c0_i32_0 : i32, i32
  }
  func.func @transform_5(%arg0: i32) -> (i32, i32) {
    %c0_i32 = arith.constant 0 : i32
    %c0_i32_0 = arith.constant 0 : i32
    return %arg0, %c0_i32 : i32, i32
  }
}

</mosaic_0001>

<llo_original>
// kernel: tpu_custom_call.1
$region0: #{tpu_custom_call.1}
  #allocation0 [shape = 'u32[]', space=smem, size = 0x4, offset = 0x4, fixed_abs, tag = 'smem constant byte address 0x4 - core index']
  #allocation1 [shape = 'u32[144,128]{1,0:T(1,128)}', space=vmem, size = 0x12000, scoped, tag = 'internal scratch']
  %s0 = inlined_call_operand.hbm [shape: bf16[8,128], index: 0, kind: input, shape index: {}]
  %s1 = inlined_call_operand.hbm [shape: bf16[128,1024], index: 1, kind: input, shape index: {}]
  %s2 = inlined_call_operand.hbm [shape: bf16[2,512,384], index: 2, kind: input, shape index: {}]
  %s3 = inlined_call_operand.hbm [shape: bf16[2,384,128], index: 3, kind: input, shape index: {}]
  %s4 = inlined_call_operand.vmem [shape: f32[1,1920], index: 4, kind: input, shape index: {}]
  %s5 = inlined_call_operand.hbm [shape: f32[8,128], index: 5, kind: output, shape index: {}]
  %s6 = sld [smem:[#allocation0]]
  $region46: #{tpu_custom_call.1} parent=0
    _
  %s8 = ssub.s32 1, %s6
  %s9 = scalar_select 0, %s8, %s6
  $region1: #{tpu_custom_call.1} parent=0
    #allocation2 [shape = 'u8[2048]{0}', space=vmem, size = 0x800, scoped, tag = 'input window, operand 0, single buffered']
    #allocation3 [shape = 's32[1]{0}', space=sflag, size = 0x4, scoped, tag = 'scoped memory for tpu_custom_call.1']
    #allocation4 [shape = 's32[1]{0}', space=sflag, size = 0x4, scoped, tag = 'scoped memory for tpu_custom_call.1']
    #allocation5 [shape = 'u8[262144]{0}', space=vmem, size = 0x40000, scoped, tag = 'input window, operand 1, single buffered']
    #allocation6 [shape = 's32[1]{0}', space=sflag, size = 0x4, scoped, tag = 'scoped memory for tpu_custom_call.1']
    #allocation7 [shape = 'u8[786432]{0}', space=vmem, size = 0xc0000, scoped, tag = 'input window, operand 2, single buffered']
    #allocation8 [shape = 'u8[196608]{0}', space=vmem, size = 0x30000, scoped, tag = 'input window, operand 3, single buffered']
    #allocation9 [shape = 's32[1]{0}', space=sflag, size = 0x4, scoped, tag = 'scoped memory for tpu_custom_call.1']
    #allocation10 [shape = 'u8[4096]{0}', space=vmem, size = 0x1000, scoped, tag = 'output window, operand 0, single buffered']
    %10 = vsyncpa [#allocation3], 0
    %11 = vsyncpa [#allocation6], 0
    %12 = vsyncpa [#allocation9], 0
    %13 = vsyncpa [#allocation4], 0
    // Predicated region
    $region2: #{tpu_custom_call.1} parent=1 // pred_check
      _
    $region3: #{tpu_custom_call.1} parent=1 // pred_check_branch
      %15 = sbr.rel (0) target = $region5
    $region4: #{tpu_custom_call.1} parent=1 // pred_region
      %s17 = ssub.s32 64, 64
      %18 = vsyncadd [#allocation3], %s17
      %s20 = sshll.u32 [#allocation2], 4
      %s21 = int_to_ptr.vmem [resolvable:$true] %s20
      %23 = dma.hbm_to_vmem [thread:$0]  %s0, 64, %s21, [#allocation3]
    $region5: #{tpu_custom_call.1} parent=1 // pred_fallthru
      _
    // Predicated region
    $region6: #{tpu_custom_call.1} parent=1 // pred_check
      _
    $region7: #{tpu_custom_call.1} parent=1 // pred_check_branch
      %25 = sbr.rel (0) target = $region9
    $region8: #{tpu_custom_call.1} parent=1 // pred_region
      %s27 = ssub.s32 8192, 8192
      %28 = vsyncadd [#allocation6], %s27
      %s29 = sshll.u32 [#allocation5], 4
      %s30 = int_to_ptr.vmem [resolvable:$true] %s29
      %35 = dma.hbm_to_vmem [thread:$0]  %s1, 8192, %s30, [#allocation6], 512, 512, 32
    $region9: #{tpu_custom_call.1} parent=1 // pred_fallthru
      _
    // Predicated region
    $region10: #{tpu_custom_call.1} parent=1 // pred_check
      _
    $region11: #{tpu_custom_call.1} parent=1 // pred_check_branch
      %37 = sbr.rel (0) target = $region13
    $region12: #{tpu_custom_call.1} parent=1 // pred_region
      %s39 = ssub.s32 24576, 24576
      %40 = vsyncadd [#allocation6], %s39
      %s41 = sshll.u32 [#allocation7], 4
      %s42 = int_to_ptr.vmem [resolvable:$true] %s41
      %47 = dma.hbm_to_vmem [thread:$0]  %s2, 24576, %s42, [#allocation6], 192, 192, 12
    $region13: #{tpu_custom_call.1} parent=1 // pred_fallthru
      _
    // Predicated region
    $region14: #{tpu_custom_call.1} parent=1 // pred_check
      _
    $region15: #{tpu_custom_call.1} parent=1 // pred_check_branch
      %49 = sbr.rel (0) target = $region17
    $region16: #{tpu_custom_call.1} parent=1 // pred_region
      %s51 = ssub.s32 6144, 6144
      %52 = vsyncadd [#allocation9], %s51
      %s53 = sshll.u32 [#allocation8], 4
      %s54 = int_to_ptr.vmem [resolvable:$true] %s53
      %59 = dma.hbm_to_vmem [thread:$0]  %s3, 6144, %s54, [#allocation9], 64, 64, 4
    $region17: #{tpu_custom_call.1} parent=1 // pred_fallthru
      _
    // Predicated region
    $region18: #{tpu_custom_call.1} parent=1 // pred_check
      _
    $region19: #{tpu_custom_call.1} parent=1 // pred_check_branch
      %61 = sbr.rel (0) target = $region21
    $region20: #{tpu_custom_call.1} parent=1 // pred_region
      _
    $region21: #{tpu_custom_call.1} parent=1 // pred_fallthru
      _
    // Predicated region
    $region22: #{tpu_custom_call.1} parent=1 // pred_check
      _
    $region23: #{tpu_custom_call.1} parent=1 // pred_check_branch
      %63 = sbr.rel (0) target = $region25
    $region24: #{tpu_custom_call.1} parent=1 // pred_region
      %64 = dma.done [#allocation3], 64
    $region25: #{tpu_custom_call.1} parent=1 // pred_fallthru
      _
    // Predicated region
    $region26: #{tpu_custom_call.1} parent=1 // pred_check
      _
    $region27: #{tpu_custom_call.1} parent=1 // pred_check_branch
      %66 = sbr.rel (0) target = $region29
    $region28: #{tpu_custom_call.1} parent=1 // pred_region
      %67 = dma.done [#allocation6], 8192
    $region29: #{tpu_custom_call.1} parent=1 // pred_fallthru
      _
    // Predicated region
    $region30: #{tpu_custom_call.1} parent=1 // pred_check
      _
    $region31: #{tpu_custom_call.1} parent=1 // pred_check_branch
      %69 = sbr.rel (0) target = $region33
    $region32: #{tpu_custom_call.1} parent=1 // pred_region
      %70 = dma.done [#allocation6], 24576
    $region33: #{tpu_custom_call.1} parent=1 // pred_fallthru
      _
    // Predicated region
    $region34: #{tpu_custom_call.1} parent=1 // pred_check
      _
    $region35: #{tpu_custom_call.1} parent=1 // pred_check_branch
      %72 = sbr.rel (0) target = $region37
    $region36: #{tpu_custom_call.1} parent=1 // pred_region
      %73 = dma.done [#allocation9], 6144
    $region37: #{tpu_custom_call.1} parent=1 // pred_fallthru
      _
    %v75 = vld [vmem:[#allocation2] sm:$0xf]
    %v76 = vld [vmem:[#allocation5] sm:$0xff]
    %v77 = vld [vmem:[#allocation5 + $0x8] sm:$0xff]
    %v78 = vld [vmem:[#allocation5 + $0x10] sm:$0xff]
    %v79 = vld [vmem:[#allocation5 + $0x18] sm:$0xff]
    %v80 = vld [vmem:[#allocation5 + $0x20] sm:$0xff]
    %v81 = vld [vmem:[#allocation5 + $0x28] sm:$0xff]
    %v82 = vld [vmem:[#allocation5 + $0x30] sm:$0xff]
    %v83 = vld [vmem:[#allocation5 + $0x38] sm:$0xff]
    %v84 = vld [vmem:[#allocation5 + $0x40] sm:$0xff]
    %v85 = vld [vmem:[#allocation5 + $0x48] sm:$0xff]
    %v86 = vld [vmem:[#allocation5 + $0x50] sm:$0xff]
    %v87 = vld [vmem:[#allocation5 + $0x58] sm:$0xff]
    %v88 = vld [vmem:[#allocation5 + $0x60] sm:$0xff]
    %v89 = vld [vmem:[#allocation5 + $0x68] sm:$0xff]
    %v90 = vld [vmem:[#allocation5 + $0x70] sm:$0xff]
    %v91 = vld [vmem:[#allocation5 + $0x78] sm:$0xff]
    %v92 = vld [vmem:[#allocation5 + $0x80] sm:$0xff]
    %v93 = vld [vmem:[#allocation5 + $0x88] sm:$0xff]
    %v94 = vld [vmem:[#allocation5 + $0x90] sm:$0xff]
    %v95 = vld [vmem:[#allocation5 + $0x98] sm:$0xff]
    %v96 = vld [vmem:[#allocation5 + $0xa0] sm:$0xff]
    %v97 = vld [vmem:[#allocation5 + $0xa8] sm:$0xff]
    %v98 = vld [vmem:[#allocation5 + $0xb0] sm:$0xff]
    %v99 = vld [vmem:[#allocation5 + $0xb8] sm:$0xff]
    %v100 = vld [vmem:[#allocation5 + $0xc0] sm:$0xff]
    %v101 = vld [vmem:[#allocation5 + $0xc8] sm:$0xff]
    %v102 = vld [vmem:[#allocation5 + $0xd0] sm:$0xff]
    %v103 = vld [vmem:[#allocation5 + $0xd8] sm:$0xff]
    %v104 = vld [vmem:[#allocation5 + $0xe0] sm:$0xff]
    %v105 = vld [vmem:[#allocation5 + $0xe8] sm:$0xff]
    %v106 = vld [vmem:[#allocation5 + $0xf0] sm:$0xff]
    %v107 = vld [vmem:[#allocation5 + $0xf8] sm:$0xff]
    %v108 = vld [vmem:[#allocation5 + $0x100] sm:$0xff]
    %v109 = vld [vmem:[#allocation5 + $0x108] sm:$0xff]
    %v110 = vld [vmem:[#allocation5 + $0x110] sm:$0xff]
    %v111 = vld [vmem:[#allocation5 + $0x118] sm:$0xff]
    %v112 = vld [vmem:[#allocation5 + $0x120] sm:$0xff]
    %v113 = vld [vmem:[#allocation5 + $0x128] sm:$0xff]
    %v114 = vld [vmem:[#allocation5 + $0x130] sm:$0xff]
    %v115 = vld [vmem:[#allocation5 + $0x138] sm:$0xff]
    %v116 = vld [vmem:[#allocation5 + $0x140] sm:$0xff]
    %v117 = vld [vmem:[#allocation5 + $0x148] sm:$0xff]
    %v118 = vld [vmem:[#allocation5 + $0x150] sm:$0xff]
    %v119 = vld [vmem:[#allocation5 + $0x158] sm:$0xff]
    %v120 = vld [vmem:[#allocation5 + $0x160] sm:$0xff]
    %v121 = vld [vmem:[#allocation5 + $0x168] sm:$0xff]
    %v122 = vld [vmem:[#allocation5 + $0x170] sm:$0xff]
    %v123 = vld [vmem:[#allocation5 + $0x178] sm:$0xff]
    %v124 = vld [vmem:[#allocation5 + $0x180] sm:$0xff]
    %v125 = vld [vmem:[#allocation5 + $0x188] sm:$0xff]
    %v126 = vld [vmem:[#allocation5 + $0x190] sm:$0xff]
    %v127 = vld [vmem:[#allocation5 + $0x198] sm:$0xff]
    %v128 = vld [vmem:[#allocation5 + $0x1a0] sm:$0xff]
    %v129 = vld [vmem:[#allocation5 + $0x1a8] sm:$0xff]
    %v130 = vld [vmem:[#allocation5 + $0x1b0] sm:$0xff]
    %v131 = vld [vmem:[#allocation5 + $0x1b8] sm:$0xff]
    %v132 = vld [vmem:[#allocation5 + $0x1c0] sm:$0xff]
    %v133 = vld [vmem:[#allocation5 + $0x1c8] sm:$0xff]
    %v134 = vld [vmem:[#allocation5 + $0x1d0] sm:$0xff]
    %v135 = vld [vmem:[#allocation5 + $0x1d8] sm:$0xff]
    %v136 = vld [vmem:[#allocation5 + $0x1e0] sm:$0xff]
    %v137 = vld [vmem:[#allocation5 + $0x1e8] sm:$0xff]
    %v138 = vld [vmem:[#allocation5 + $0x1f0] sm:$0xff]
    %v139 = vld [vmem:[#allocation5 + $0x1f8] sm:$0xff]
    %v140 = vld [vmem:[%s4] sm:$0xff]
    %v142 = vlaneseq
    %v143 = vshrl.u32 %v142, 7
    %v144 = vsub.s32 0, %v143
    %v145 = vrot.slane %v140, %v144
    %v146 = vlaneseq
    %v147 = vshrl.u32 %v146, 7
    %v148 = vsub.s32 1, %v147
    %v149 = vrot.slane %v140, %v148
    %v150 = vlaneseq
    %v151 = vshrl.u32 %v150, 7
    %v152 = vsub.s32 2, %v151
    %v153 = vrot.slane %v140, %v152
    %v154 = vlaneseq
    %v155 = vshrl.u32 %v154, 7
    %v156 = vsub.s32 3, %v155
    %v157 = vrot.slane %v140, %v156
    %v158 = vlaneseq
    %v159 = vshrl.u32 %v158, 7
    %v160 = vsub.s32 4, %v159
    %v161 = vrot.slane %v140, %v160
    %v162 = vlaneseq
    %v163 = vshrl.u32 %v162, 7
    %v164 = vsub.s32 5, %v163
    %v165 = vrot.slane %v140, %v164
    %v166 = vlaneseq
    %v167 = vshrl.u32 %v166, 7
    %v168 = vsub.s32 6, %v167
    %v169 = vrot.slane %v140, %v168
    %v170 = vlaneseq
    %v171 = vshrl.u32 %v170, 7
    %v172 = vsub.s32 7, %v171
    %v173 = vrot.slane %v140, %v172
    %v246 = vunpack.c.l.b16 %v76
    %v247 = vunpack.c.h.b16 %v76
    %v248 = vunpack.c.l.b16 %v77
    %v249 = vunpack.c.h.b16 %v77
    %v250 = vunpack.c.l.b16 %v78
    %v251 = vunpack.c.h.b16 %v78
    %v252 = vunpack.c.l.b16 %v79
    %v253 = vunpack.c.h.b16 %v79
    %v254 = vunpack.c.l.b16 %v80
    %v255 = vunpack.c.h.b16 %v80
    %v256 = vunpack.c.l.b16 %v81
    %v257 = vunpack.c.h.b16 %v81
    %v258 = vunpack.c.l.b16 %v82
    %v259 = vunpack.c.h.b16 %v82
    %v260 = vunpack.c.l.b16 %v83
    %v261 = vunpack.c.h.b16 %v83
    %v262 = vunpack.c.l.b16 %v84
    %v263 = vunpack.c.h.b16 %v84
    %v264 = vunpack.c.l.b16 %v85
    %v265 = vunpack.c.h.b16 %v85
    %v266 = vunpack.c.l.b16 %v86
    %v267 = vunpack.c.h.b16 %v86
    %v268 = vunpack.c.l.b16 %v87
    %v269 = vunpack.c.h.b16 %v87
    %v270 = vunpack.c.l.b16 %v88
    %v271 = vunpack.c.h.b16 %v88
    %v272 = vunpack.c.l.b16 %v89
    %v273 = vunpack.c.h.b16 %v89
    %v274 = vunpack.c.l.b16 %v90
    %v275 = vunpack.c.h.b16 %v90
    %v276 = vunpack.c.l.b16 %v91
    %v277 = vunpack.c.h.b16 %v91
    %v278 = vunpack.c.l.b16 %v92
    %v279 = vunpack.c.h.b16 %v92
    %v280 = vunpack.c.l.b16 %v93
    %v281 = vunpack.c.h.b16 %v93
    %v282 = vunpack.c.l.b16 %v94
    %v283 = vunpack.c.h.b16 %v94
    %v284 = vunpack.c.l.b16 %v95
    %v285 = vunpack.c.h.b16 %v95
    %v286 = vunpack.c.l.b16 %v96
    %v287 = vunpack.c.h.b16 %v96
    %v288 = vunpack.c.l.b16 %v97
    %v289 = vunpack.c.h.b16 %v97
    %v290 = vunpack.c.l.b16 %v98
    %v291 = vunpack.c.h.b16 %v98
    %v292 = vunpack.c.l.b16 %v99
    %v293 = vunpack.c.h.b16 %v99
    %v294 = vunpack.c.l.b16 %v100
    %v295 = vunpack.c.h.b16 %v100
    %v296 = vunpack.c.l.b16 %v101
    %v297 = vunpack.c.h.b16 %v101
    %v298 = vunpack.c.l.b16 %v102
    %v299 = vunpack.c.h.b16 %v102
    %v300 = vunpack.c.l.b16 %v103
    %v301 = vunpack.c.h.b16 %v103
    %v302 = vunpack.c.l.b16 %v104
    %v303 = vunpack.c.h.b16 %v104
    %v304 = vunpack.c.l.b16 %v105
    %v305 = vunpack.c.h.b16 %v105
    %v306 = vunpack.c.l.b16 %v106
    %v307 = vunpack.c.h.b16 %v106
    %v308 = vunpack.c.l.b16 %v107
    %v309 = vunpack.c.h.b16 %v107
    %v310 = vunpack.c.l.b16 %v108
    %v311 = vunpack.c.h.b16 %v108
    %v312 = vunpack.c.l.b16 %v109
    %v313 = vunpack.c.h.b16 %v109
    %v314 = vunpack.c.l.b16 %v110
    %v315 = vunpack.c.h.b16 %v110
    %v316 = vunpack.c.l.b16 %v111
    %v317 = vunpack.c.h.b16 %v111
    %v318 = vunpack.c.l.b16 %v112
    %v319 = vunpack.c.h.b16 %v112
    %v320 = vunpack.c.l.b16 %v113
    %v321 = vunpack.c.h.b16 %v113
    %v322 = vunpack.c.l.b16 %v114
    %v323 = vunpack.c.h.b16 %v114
    %v324 = vunpack.c.l.b16 %v115
    %v325 = vunpack.c.h.b16 %v115
    %v326 = vunpack.c.l.b16 %v116
    %v327 = vunpack.c.h.b16 %v116
    %v328 = vunpack.c.l.b16 %v117
    %v329 = vunpack.c.h.b16 %v117
    %v330 = vunpack.c.l.b16 %v118
    %v331 = vunpack.c.h.b16 %v118
    %v332 = vunpack.c.l.b16 %v119
    %v333 = vunpack.c.h.b16 %v119
    %v334 = vunpack.c.l.b16 %v120
    %v335 = vunpack.c.h.b16 %v120
    %v336 = vunpack.c.l.b16 %v121
    %v337 = vunpack.c.h.b16 %v121
    %v338 = vunpack.c.l.b16 %v122
    %v339 = vunpack.c.h.b16 %v122
    %v340 = vunpack.c.l.b16 %v123
    %v341 = vunpack.c.h.b16 %v123
    %v342 = vunpack.c.l.b16 %v124
    %v343 = vunpack.c.h.b16 %v124
    %v344 = vunpack.c.l.b16 %v125
    %v345 = vunpack.c.h.b16 %v125
    %v346 = vunpack.c.l.b16 %v126
    %v347 = vunpack.c.h.b16 %v126
    %v348 = vunpack.c.l.b16 %v127
    %v349 = vunpack.c.h.b16 %v127
    %v350 = vunpack.c.l.b16 %v128
    %v351 = vunpack.c.h.b16 %v128
    %v352 = vunpack.c.l.b16 %v129
    %v353 = vunpack.c.h.b16 %v129
    %v354 = vunpack.c.l.b16 %v130
    %v355 = vunpack.c.h.b16 %v130
    %v356 = vunpack.c.l.b16 %v131
    %v357 = vunpack.c.h.b16 %v131
    %v358 = vunpack.c.l.b16 %v132
    %v359 = vunpack.c.h.b16 %v132
    %v360 = vunpack.c.l.b16 %v133
    %v361 = vunpack.c.h.b16 %v133
    %v362 = vunpack.c.l.b16 %v134
    %v363 = vunpack.c.h.b16 %v134
    %v364 = vunpack.c.l.b16 %v135
    %v365 = vunpack.c.h.b16 %v135
    %v366 = vunpack.c.l.b16 %v136
    %v367 = vunpack.c.h.b16 %v136
    %v368 = vunpack.c.l.b16 %v137
    %v369 = vunpack.c.h.b16 %v137
    %v370 = vunpack.c.l.b16 %v138
    %v371 = vunpack.c.h.b16 %v138
    %v372 = vunpack.c.l.b16 %v139
    %v373 = vunpack.c.h.b16 %v139
    %v374 = vpack.c.b16 %v254, %v246
    %v375 = vpack.c.b16 %v255, %v247
    %v376 = vpack.c.b16 %v256, %v248
    %v377 = vpack.c.b16 %v257, %v249
    %v378 = vpack.c.b16 %v258, %v250
    %v379 = vpack.c.b16 %v259, %v251
    %v380 = vpack.c.b16 %v260, %v252
    %v381 = vpack.c.b16 %v261, %v253
    %v382 = vpack.c.b16 %v270, %v262
    %v383 = vpack.c.b16 %v271, %v263
    %v384 = vpack.c.b16 %v272, %v264
    %v385 = vpack.c.b16 %v273, %v265
    %v386 = vpack.c.b16 %v274, %v266
    %v387 = vpack.c.b16 %v275, %v267
    %v388 = vpack.c.b16 %v276, %v268
    %v389 = vpack.c.b16 %v277, %v269
    %v390 = vpack.c.b16 %v286, %v278
    %v391 = vpack.c.b16 %v287, %v279
    %v392 = vpack.c.b16 %v288, %v280
    %v393 = vpack.c.b16 %v289, %v281
    %v394 = vpack.c.b16 %v290, %v282
    %v395 = vpack.c.b16 %v291, %v283
    %v396 = vpack.c.b16 %v292, %v284
    %v397 = vpack.c.b16 %v293, %v285
    %v398 = vpack.c.b16 %v302, %v294
    %v399 = vpack.c.b16 %v303, %v295
    %v400 = vpack.c.b16 %v304, %v296
    %v401 = vpack.c.b16 %v305, %v297
    %v402 = vpack.c.b16 %v306, %v298
    %v403 = vpack.c.b16 %v307, %v299
    %v404 = vpack.c.b16 %v308, %v300
    %v405 = vpack.c.b16 %v309, %v301
    %v406 = vpack.c.b16 %v318, %v310
    %v407 = vpack.c.b16 %v319, %v311
    %v408 = vpack.c.b16 %v320, %v312
    %v409 = vpack.c.b16 %v321, %v313
    %v410 = vpack.c.b16 %v322, %v314
    %v411 = vpack.c.b16 %v323, %v315
    %v412 = vpack.c.b16 %v324, %v316
    %v413 = vpack.c.b16 %v325, %v317
    %v414 = vpack.c.b16 %v334, %v326
    %v415 = vpack.c.b16 %v335, %v327
    %v416 = vpack.c.b16 %v336, %v328
    %v417 = vpack.c.b16 %v337, %v329
    %v418 = vpack.c.b16 %v338, %v330
    %v419 = vpack.c.b16 %v339, %v331
    %v420 = vpack.c.b16 %v340, %v332
    %v421 = vpack.c.b16 %v341, %v333
    %v422 = vpack.c.b16 %v350, %v342
    %v423 = vpack.c.b16 %v351, %v343
    %v424 = vpack.c.b16 %v352, %v344
    %v425 = vpack.c.b16 %v353, %v345
    %v426 = vpack.c.b16 %v354, %v346
    %v427 = vpack.c.b16 %v355, %v347
    %v428 = vpack.c.b16 %v356, %v348
    %v429 = vpack.c.b16 %v357, %v349
    %v430 = vpack.c.b16 %v366, %v358
    %v431 = vpack.c.b16 %v367, %v359
    %v432 = vpack.c.b16 %v368, %v360
    %v433 = vpack.c.b16 %v369, %v361
    %v434 = vpack.c.b16 %v370, %v362
    %v435 = vpack.c.b16 %v371, %v363
    %v436 = vpack.c.b16 %v372, %v364
    %v437 = vpack.c.b16 %v373, %v365
    %502 = vmatprep.subr.bf16.mxu0 %v375
    %503 = vmatpush1.bf16.msra.mxu0 %v374
    %504 = vmatprep.subr.bf16.mxu0 %v383
    %505 = vmatpush1.bf16.msra.mxu0 %v382
    %506 = vmatprep.subr.bf16.mxu0 %v391
    %507 = vmatpush1.bf16.msra.mxu0 %v390
    %508 = vmatprep.subr.bf16.mxu0 %v399
    %509 = vmatpush1.bf16.msra.mxu0 %v398
    %510 = vmatprep.subr.bf16.mxu0 %v407
    %511 = vmatpush1.bf16.msra.mxu0 %v406
    %512 = vmatprep.subr.bf16.mxu0 %v415
    %513 = vmatpush1.bf16.msra.mxu0 %v414
    %514 = vmatprep.subr.bf16.mxu0 %v423
    %515 = vmatpush1.bf16.msra.mxu0 %v422
    %516 = vmatprep.subr.bf16.mxu0 %v431
    %517 = vmatpush1.bf16.msra.mxu0 %v430
    %518 = vmatprep.subr.bf16.mxu0 0
    %519 = vmatpush1.bf16.msra.mxu0 0
    %520 = vmatprep.subr.bf16.mxu0 0
    %521 = vmatpush1.bf16.msra.mxu0 0
    %522 = vmatprep.subr.bf16.mxu0 0
    %523 = vmatpush1.bf16.msra.mxu0 0
    %524 = vmatprep.subr.bf16.mxu0 0
    %525 = vmatpush1.bf16.msra.mxu0 0
    %526 = vmatprep.subr.bf16.mxu0 0
    %527 = vmatpush1.bf16.msra.mxu0 0
    %528 = vmatprep.subr.bf16.mxu0 0
    %529 = vmatpush1.bf16.msra.mxu0 0
    %530 = vmatprep.subr.bf16.mxu0 0
    %531 = vmatpush1.bf16.msra.mxu0 0
    %532 = vmatprep.subr.bf16.mxu0 0
    %533 = vmatpush1.bf16.msra.mxu0 0
    %534 = vmatprep.mubr.bf16.mxu0 0
    %535 = vmatmul.mubr.bf16.gmra.mrb[0].mxu0 %v75
    %v536 = vpop.f32.mrb[0].mxu0
    %v537 = vadd.f32 %v145, %v536
    %v538 = vpop.f32.mrb[0].mxu0
    %v539 = vadd.f32 %v149, %v538
    %v540 = vpop.f32.mrb[0].mxu0
    %v541 = vpop.f32.mrb[0].mxu0
    %542 = vdwg.mxu0
    %543 = vmatprep.subr.bf16.mxu0 %v377
    %544 = vmatpush1.bf16.msra.mxu0 %v376
    %545 = vmatprep.subr.bf16.mxu0 %v385
    %546 = vmatpush1.bf16.msra.mxu0 %v384
    %547 = vmatprep.subr.bf16.mxu0 %v393
    %548 = vmatpush1.bf16.msra.mxu0 %v392
    %549 = vmatprep.subr.bf16.mxu0 %v401
    %550 = vmatpush1.bf16.msra.mxu0 %v400
    %551 = vmatprep.subr.bf16.mxu0 %v409
    %552 = vmatpush1.bf16.msra.mxu0 %v408
    %553 = vmatprep.subr.bf16.mxu0 %v417
    %554 = vmatpush1.bf16.msra.mxu0 %v416
    %555 = vmatprep.subr.bf16.mxu0 %v425
    %556 = vmatpush1.bf16.msra.mxu0 %v424
    %557 = vmatprep.subr.bf16.mxu0 %v433
    %558 = vmatpush1.bf16.msra.mxu0 %v432
    %559 = vmatprep.subr.bf16.mxu0 0
    %560 = vmatpush1.bf16.msra.mxu0 0
    %561 = vmatprep.subr.bf16.mxu0 0
    %562 = vmatpush1.bf16.msra.mxu0 0
    %563 = vmatprep.subr.bf16.mxu0 0
    %564 = vmatpush1.bf16.msra.mxu0 0
    %565 = vmatprep.subr.bf16.mxu0 0
    %566 = vmatpush1.bf16.msra.mxu0 0
    %567 = vmatprep.subr.bf16.mxu0 0
    %568 = vmatpush1.bf16.msra.mxu0 0
    %569 = vmatprep.subr.bf16.mxu0 0
    %570 = vmatpush1.bf16.msra.mxu0 0
    %571 = vmatprep.subr.bf16.mxu0 0
    %572 = vmatpush1.bf16.msra.mxu0 0
    %573 = vmatprep.subr.bf16.mxu0 0
    %574 = vmatpush1.bf16.msra.mxu0 0
    %575 = vmatprep.mubr.bf16.mxu0 0
    %576 = vmatmul.mubr.bf16.gmra.mrb[0].mxu0 %v75
    %v577 = vpop.f32.mrb[0].mxu0
    %v578 = vadd.f32 %v153, %v577
    %v579 = vpop.f32.mrb[0].mxu0
    %v580 = vadd.f32 %v157, %v579
    %v581 = vpop.f32.mrb[0].mxu0
    %v582 = vpop.f32.mrb[0].mxu0
    %583 = vdwg.mxu0
    %584 = vmatprep.subr.bf16.mxu0 %v379
    %585 = vmatpush1.bf16.msra.mxu0 %v378
    %586 = vmatprep.subr.bf16.mxu0 %v387
    %587 = vmatpush1.bf16.msra.mxu0 %v386
    %588 = vmatprep.subr.bf16.mxu0 %v395
    %589 = vmatpush1.bf16.msra.mxu0 %v394
    %590 = vmatprep.subr.bf16.mxu0 %v403
    %591 = vmatpush1.bf16.msra.mxu0 %v402
    %592 = vmatprep.subr.bf16.mxu0 %v411
    %593 = vmatpush1.bf16.msra.mxu0 %v410
    %594 = vmatprep.subr.bf16.mxu0 %v419
    %595 = vmatpush1.bf16.msra.mxu0 %v418
    %596 = vmatprep.subr.bf16.mxu0 %v427
    %597 = vmatpush1.bf16.msra.mxu0 %v426
    %598 = vmatprep.subr.bf16.mxu0 %v435
    %599 = vmatpush1.bf16.msra.mxu0 %v434
    %600 = vmatprep.subr.bf16.mxu0 0
    %601 = vmatpush1.bf16.msra.mxu0 0
    %602 = vmatprep.subr.bf16.mxu0 0
    %603 = vmatpush1.bf16.msra.mxu0 0
    %604 = vmatprep.subr.bf16.mxu0 0
    %605 = vmatpush1.bf16.msra.mxu0 0
    %606 = vmatprep.subr.bf16.mxu0 0
    %607 = vmatpush1.bf16.msra.mxu0 0
    %608 = vmatprep.subr.bf16.mxu0 0
    %609 = vmatpush1.bf16.msra.mxu0 0
    %610 = vmatprep.subr.bf16.mxu0 0
    %611 = vmatpush1.bf16.msra.mxu0 0
    %612 = vmatprep.subr.bf16.mxu0 0
    %613 = vmatpush1.bf16.msra.mxu0 0
    %614 = vmatprep.subr.bf16.mxu0 0
    %615 = vmatpush1.bf16.msra.mxu0 0
    %616 = vmatprep.mubr.bf16.mxu0 0
    %617 = vmatmul.mubr.bf16.gmra.mrb[0].mxu0 %v75
    %v618 = vpop.f32.mrb[0].mxu0
    %v619 = vadd.f32 %v161, %v618
    %v620 = vpop.f32.mrb[0].mxu0
    %v621 = vadd.f32 %v165, %v620
    %v622 = vpop.f32.mrb[0].mxu0
    %v623 = vpop.f32.mrb[0].mxu0
    %624 = vdwg.mxu0
    %625 = vmatprep.subr.bf16.mxu0 %v381
    %626 = vmatpush1.bf16.msra.mxu0 %v380
    %627 = vmatprep.subr.bf16.mxu0 %v389
    %628 = vmatpush1.bf16.msra.mxu0 %v388
    %629 = vmatprep.subr.bf16.mxu0 %v397
    %630 = vmatpush1.bf16.msra.mxu0 %v396
    %631 = vmatprep.subr.bf16.mxu0 %v405
    %632 = vmatpush1.bf16.msra.mxu0 %v404
    %633 = vmatprep.subr.bf16.mxu0 %v413
    %634 = vmatpush1.bf16.msra.mxu0 %v412
    %635 = vmatprep.subr.bf16.mxu0 %v421
    %636 = vmatpush1.bf16.msra.mxu0 %v420
    %637 = vmatprep.subr.bf16.mxu0 %v429
    %638 = vmatpush1.bf16.msra.mxu0 %v428
    %639 = vmatprep.subr.bf16.mxu0 %v437
    %640 = vmatpush1.bf16.msra.mxu0 %v436
    %641 = vmatprep.subr.bf16.mxu0 0
    %642 = vmatpush1.bf16.msra.mxu0 0
    %643 = vmatprep.subr.bf16.mxu0 0
    %644 = vmatpush1.bf16.msra.mxu0 0
    %645 = vmatprep.subr.bf16.mxu0 0
    %646 = vmatpush1.bf16.msra.mxu0 0
    %647 = vmatprep.subr.bf16.mxu0 0
    %648 = vmatpush1.bf16.msra.mxu0 0
    %649 = vmatprep.subr.bf16.mxu0 0
    %650 = vmatpush1.bf16.msra.mxu0 0
    %651 = vmatprep.subr.bf16.mxu0 0
    %652 = vmatpush1.bf16.msra.mxu0 0
    %653 = vmatprep.subr.bf16.mxu0 0
    %654 = vmatpush1.bf16.msra.mxu0 0
    %655 = vmatprep.subr.bf16.mxu0 0
    %656 = vmatpush1.bf16.msra.mxu0 0
    %657 = vmatprep.mubr.bf16.mxu0 0
    %658 = vmatmul.mubr.bf16.gmra.mrb[0].mxu0 %v75
    %v659 = vpop.f32.mrb[0].mxu0
    %v660 = vadd.f32 %v169, %v659
    %v661 = vpop.f32.mrb[0].mxu0
    %v662 = vadd.f32 %v173, %v661
    %v663 = vpop.f32.mrb[0].mxu0
    %v664 = vpop.f32.mrb[0].mxu0
    %665 = vdwg.mxu0
    %v666 = vmax.f32 %v537, 0.0
    %v667 = vmax.f32 %v539, 0.0
    %v668 = vmax.f32 %v578, 0.0
    %v669 = vmax.f32 %v580, 0.0
    %v670 = vmax.f32 %v619, 0.0
    %v671 = vmax.f32 %v621, 0.0
    %v672 = vmax.f32 %v660, 0.0
    %v673 = vmax.f32 %v662, 0.0
    %v674 = vpack.c.bf16 %v666, %v666
    %v675 = vpack.c.bf16 %v667, %v667
    %v676 = vpack.c.bf16 %v668, %v668
    %v677 = vpack.c.bf16 %v669, %v669
    %v678 = vpack.c.bf16 %v670, %v670
    %v679 = vpack.c.bf16 %v671, %v671
    %v680 = vpack.c.bf16 %v672, %v672
    %v681 = vpack.c.bf16 %v673, %v673
    %v682 = vld [vmem:[#allocation7] sm:$0xff]
    %v683 = vld [vmem:[#allocation7 + $0x8] sm:$0xf]
    %v684 = vld [vmem:[#allocation7 + $0xc] sm:$0xff]
    %v685 = vld [vmem:[#allocation7 + $0x14] sm:$0xf]
    %v686 = vld [vmem:[#allocation7 + $0x18] sm:$0xff]
    %v687 = vld [vmem:[#allocation7 + $0x20] sm:$0xf]
    %v688 = vld [vmem:[#allocation7 + $0x24] sm:$0xff]
    %v689 = vld [vmem:[#allocation7 + $0x2c] sm:$0xf]
    %v690 = vld [vmem:[#allocation7 + $0x30] sm:$0xff]
    %v691 = vld [vmem:[#allocation7 + $0x38] sm:$0xf]
    %v692 = vld [vmem:[#allocation7 + $0x3c] sm:$0xff]
    %v693 = vld [vmem:[#allocation7 + $0x44] sm:$0xf]
    %v694 = vld [vmem:[#allocation7 + $0x48] sm:$0xff]
    %v695 = vld [vmem:[#allocation7 + $0x50] sm:$0xf]
    %v696 = vld [vmem:[#allocation7 + $0x54] sm:$0xff]
    %v697 = vld [vmem:[#allocation7 + $0x5c] sm:$0xf]
    %v698 = vld [vmem:[#allocation7 + $0x60] sm:$0xff]
    %v699 = vld [vmem:[#allocation7 + $0x68] sm:$0xf]
    %v700 = vld [vmem:[#allocation7 + $0x6c] sm:$0xff]
    %v701 = vld [vmem:[#allocation7 + $0x74] sm:$0xf]
    %v702 = vld [vmem:[#allocation7 + $0x78] sm:$0xff]
    %v703 = vld [vmem:[#allocation7 + $0x80] sm:$0xf]
    %v704 = vld [vmem:[#allocation7 + $0x84] sm:$0xff]
    %v705 = vld [vmem:[#allocation7 + $0x8c] sm:$0xf]
    %v706 = vld [vmem:[#allocation7 + $0x90] sm:$0xff]
    %v707 = vld [vmem:[#allocation7 + $0x98] sm:$0xf]
    %v708 = vld [vmem:[#allocation7 + $0x9c] sm:$0xff]
    %v709 = vld [vmem:[#allocation7 + $0xa4] sm:$0xf]
    %v710 = vld [vmem:[#allocation7 + $0xa8] sm:$0xff]
    %v711 = vld [vmem:[#allocation7 + $0xb0] sm:$0xf]
    %v712 = vld [vmem:[#allocation7 + $0xb4] sm:$0xff]
    %v713 = vld [vmem:[#allocation7 + $0xbc] sm:$0xf]
    %v714 = vld [vmem:[#allocation7 + $0xc0] sm:$0xff]
    %v715 = vld [vmem:[#allocation7 + $0xc8] sm:$0xf]
    %v716 = vld [vmem:[#allocation7 + $0xcc] sm:$0xff]
    %v717 = vld [vmem:[#allocation7 + $0xd4] sm:$0xf]
    %v718 = vld [vmem:[#allocation7 + $0xd8] sm:$0xff]
    %v719 = vld [vmem:[#allocation7 + $0xe0] sm:$0xf]
    %v720 = vld [vmem:[#allocation7 + $0xe4] sm:$0xff]
    %v721 = vld [vmem:[#allocation7 + $0xec] sm:$0xf]
    %v722 = vld [vmem:[#allocation7 + $0xf0] sm:$0xff]
    %v723 = vld [vmem:[#allocation7 + $0xf8] sm:$0xf]
    %v724 = vld [vmem:[#allocation7 + $0xfc] sm:$0xff]
    %v725 = vld [vmem:[#allocation7 + $0x104] sm:$0xf]
    %v726 = vld [vmem:[#allocation7 + $0x108] sm:$0xff]
    %v727 = vld [vmem:[#allocation7 + $0x110] sm:$0xf]
    %v728 = vld [vmem:[#allocation7 + $0x114] sm:$0xff]
    %v729 = vld [vmem:[#allocation7 + $0x11c] sm:$0xf]
    %v730 = vld [vmem:[#allocation7 + $0x120] sm:$0xff]
    %v731 = vld [vmem:[#allocation7 + $0x128] sm:$0xf]
    %v732 = vld [vmem:[#allocation7 + $0x12c] sm:$0xff]
    %v733 = vld [vmem:[#allocation7 + $0x134] sm:$0xf]
    %v734 = vld [vmem:[#allocation7 + $0x138] sm:$0xff]
    %v735 = vld [vmem:[#allocation7 + $0x140] sm:$0xf]
    %v736 = vld [vmem:[#allocation7 + $0x144] sm:$0xff]
    %v737 = vld [vmem:[#allocation7 + $0x14c] sm:$0xf]
    %v738 = vld [vmem:[#allocation7 + $0x150] sm:$0xff]
    %v739 = vld [vmem:[#allocation7 + $0x158] sm:$0xf]
    %v740 = vld [vmem:[#allocation7 + $0x15c] sm:$0xff]
    %v741 = vld [vmem:[#allocation7 + $0x164] sm:$0xf]
    %v742 = vld [vmem:[#allocation7 + $0x168] sm:$0xff]
    %v743 = vld [vmem:[#allocation7 + $0x170] sm:$0xf]
    %v744 = vld [vmem:[#allocation7 + $0x174] sm:$0xff]
    %v745 = vld [vmem:[#allocation7 + $0x17c] sm:$0xf]
    %v746 = vld [vmem:[#allocation7 + $0x180] sm:$0xff]
    %v747 = vld [vmem:[#allocation7 + $0x188] sm:$0xf]
    %v748 = vld [vmem:[#allocation7 + $0x18c] sm:$0xff]
    %v749 = vld [vmem:[#allocation7 + $0x194] sm:$0xf]
    %v750 = vld [vmem:[#allocation7 + $0x198] sm:$0xff]
    %v751 = vld [vmem:[#allocation7 + $0x1a0] sm:$0xf]
    %v752 = vld [vmem:[#allocation7 + $0x1a4] sm:$0xff]
    %v753 = vld [vmem:[#allocation7 + $0x1ac] sm:$0xf]
    %v754 = vld [vmem:[#allocation7 + $0x1b0] sm:$0xff]
    %v755 = vld [vmem:[#allocation7 + $0x1b8] sm:$0xf]
    %v756 = vld [vmem:[#allocation7 + $0x1bc] sm:$0xff]
    %v757 = vld [vmem:[#allocation7 + $0x1c4] sm:$0xf]
    %v758 = vld [vmem:[#allocation7 + $0x1c8] sm:$0xff]
    %v759 = vld [vmem:[#allocation7 + $0x1d0] sm:$0xf]
    %v760 = vld [vmem:[#allocation7 + $0x1d4] sm:$0xff]
    %v761 = vld [vmem:[#allocation7 + $0x1dc] sm:$0xf]
    %v762 = vld [vmem:[#allocation7 + $0x1e0] sm:$0xff]
    %v763 = vld [vmem:[#allocation7 + $0x1e8] sm:$0xf]
    %v764 = vld [vmem:[#allocation7 + $0x1ec] sm:$0xff]
    %v765 = vld [vmem:[#allocation7 + $0x1f4] sm:$0xf]
    %v766 = vld [vmem:[#allocation7 + $0x1f8] sm:$0xff]
    %v767 = vld [vmem:[#allocation7 + $0x200] sm:$0xf]
    %v768 = vld [vmem:[#allocation7 + $0x204] sm:$0xff]
    %v769 = vld [vmem:[#allocation7 + $0x20c] sm:$0xf]
    %v770 = vld [vmem:[#allocation7 + $0x210] sm:$0xff]
    %v771 = vld [vmem:[#allocation7 + $0x218] sm:$0xf]
    %v772 = vld [vmem:[#allocation7 + $0x21c] sm:$0xff]
    %v773 = vld [vmem:[#allocation7 + $0x224] sm:$0xf]
    %v774 = vld [vmem:[#allocation7 + $0x228] sm:$0xff]
    %v775 = vld [vmem:[#allocation7 + $0x230] sm:$0xf]
    %v776 = vld [vmem:[#allocation7 + $0x234] sm:$0xff]
    %v777 = vld [vmem:[#allocation7 + $0x23c] sm:$0xf]
    %v778 = vld [vmem:[#allocation7 + $0x240] sm:$0xff]
    %v779 = vld [vmem:[#allocation7 + $0x248] sm:$0xf]
    %v780 = vld [vmem:[#allocation7 + $0x24c] sm:$0xff]
    %v781 = vld [vmem:[#allocation7 + $0x254] sm:$0xf]
    %v782 = vld [vmem:[#allocation7 + $0x258] sm:$0xff]
    %v783 = vld [vmem:[#allocation7 + $0x260] sm:$0xf]
    %v784 = vld [vmem:[#allocation7 + $0x264] sm:$0xff]
    %v785 = vld [vmem:[#allocation7 + $0x26c] sm:$0xf]
    %v786 = vld [vmem:[#allocation7 + $0x270] sm:$0xff]
    %v787 = vld [vmem:[#allocation7 + $0x278] sm:$0xf]
    %v788 = vld [vmem:[#allocation7 + $0x27c] sm:$0xff]
    %v789 = vld [vmem:[#allocation7 + $0x284] sm:$0xf]
    %v790 = vld [vmem:[#allocation7 + $0x288] sm:$0xff]
    %v791 = vld [vmem:[#allocation7 + $0x290] sm:$0xf]
    %v792 = vld [vmem:[#allocation7 + $0x294] sm:$0xff]
    %v793 = vld [vmem:[#allocation7 + $0x29c] sm:$0xf]
    %v794 = vld [vmem:[#allocation7 + $0x2a0] sm:$0xff]
    %v795 = vld [vmem:[#allocation7 + $0x2a8] sm:$0xf]
    %v796 = vld [vmem:[#allocation7 + $0x2ac] sm:$0xff]
    %v797 = vld [vmem:[#allocation7 + $0x2b4] sm:$0xf]
    %v798 = vld [vmem:[#allocation7 + $0x2b8] sm:$0xff]
    %v799 = vld [vmem:[#allocation7 + $0x2c0] sm:$0xf]
    %v800 = vld [vmem:[#allocation7 + $0x2c4] sm:$0xff]
    %v801 = vld [vmem:[#allocation7 + $0x2cc] sm:$0xf]
    %v802 = vld [vmem:[#allocation7 + $0x2d0] sm:$0xff]
    %v803 = vld [vmem:[#allocation7 + $0x2d8] sm:$0xf]
    %v804 = vld [vmem:[#allocation7 + $0x2dc] sm:$0xff]
    %v805 = vld [vmem:[#allocation7 + $0x2e4] sm:$0xf]
    %v806 = vld [vmem:[#allocation7 + $0x2e8] sm:$0xff]
    %v807 = vld [vmem:[#allocation7 + $0x2f0] sm:$0xf]
    %v808 = vld [vmem:[#allocation7 + $0x2f4] sm:$0xff]
    %v809 = vld [vmem:[#allocation7 + $0x2fc] sm:$0xf]
    %v810 = vld [vmem:[%s4 + $0x8] sm:$0x7]
    %v812 = vlaneseq
    %v813 = vshrl.u32 %v812, 7
    %v814 = vsub.s32 0, %v813
    %v815 = vrot.slane %v810, %v814
    %v816 = vlaneseq
    %v817 = vshrl.u32 %v816, 7
    %v818 = vsub.s32 1, %v817
    %v819 = vrot.slane %v810, %v818
    %v820 = vlaneseq
    %v821 = vshrl.u32 %v820, 7
    %v822 = vsub.s32 2, %v821
    %v823 = vrot.slane %v810, %v822
    %v955 = vunpack.c.l.b16 %v682
    %v956 = vunpack.c.h.b16 %v682
    %v957 = vunpack.c.l.b16 %v683
    %v958 = vunpack.c.l.b16 %v684
    %v959 = vunpack.c.h.b16 %v684
    %v960 = vunpack.c.l.b16 %v685
    %v961 = vunpack.c.l.b16 %v686
    %v962 = vunpack.c.h.b16 %v686
    %v963 = vunpack.c.l.b16 %v687
    %v964 = vunpack.c.l.b16 %v688
    %v965 = vunpack.c.h.b16 %v688
    %v966 = vunpack.c.l.b16 %v689
    %v967 = vunpack.c.l.b16 %v690
    %v968 = vunpack.c.h.b16 %v690
    %v969 = vunpack.c.l.b16 %v691
    %v970 = vunpack.c.l.b16 %v692
    %v971 = vunpack.c.h.b16 %v692
    %v972 = vunpack.c.l.b16 %v693
    %v973 = vunpack.c.l.b16 %v694
    %v974 = vunpack.c.h.b16 %v694
    %v975 = vunpack.c.l.b16 %v695
    %v976 = vunpack.c.l.b16 %v696
    %v977 = vunpack.c.h.b16 %v696
    %v978 = vunpack.c.l.b16 %v697
    %v979 = vunpack.c.l.b16 %v698
    %v980 = vunpack.c.h.b16 %v698
    %v981 = vunpack.c.l.b16 %v699
    %v982 = vunpack.c.l.b16 %v700
    %v983 = vunpack.c.h.b16 %v700
    %v984 = vunpack.c.l.b16 %v701
    %v985 = vunpack.c.l.b16 %v702
    %v986 = vunpack.c.h.b16 %v702
    %v987 = vunpack.c.l.b16 %v703
    %v988 = vunpack.c.l.b16 %v704
    %v989 = vunpack.c.h.b16 %v704
    %v990 = vunpack.c.l.b16 %v705
    %v991 = vunpack.c.l.b16 %v706
    %v992 = vunpack.c.h.b16 %v706
    %v993 = vunpack.c.l.b16 %v707
    %v994 = vunpack.c.l.b16 %v708
    %v995 = vunpack.c.h.b16 %v708
    %v996 = vunpack.c.l.b16 %v709
    %v997 = vunpack.c.l.b16 %v710
    %v998 = vunpack.c.h.b16 %v710
    %v999 = vunpack.c.l.b16 %v711
    %v1000 = vunpack.c.l.b16 %v712
    %v1001 = vunpack.c.h.b16 %v712
    %v1002 = vunpack.c.l.b16 %v713
    %v1003 = vunpack.c.l.b16 %v714
    %v1004 = vunpack.c.h.b16 %v714
    %v1005 = vunpack.c.l.b16 %v715
    %v1006 = vunpack.c.l.b16 %v716
    %v1007 = vunpack.c.h.b16 %v716
    %v1008 = vunpack.c.l.b16 %v717
    %v1009 = vunpack.c.l.b16 %v718
    %v1010 = vunpack.c.h.b16 %v718
    %v1011 = vunpack.c.l.b16 %v719
    %v1012 = vunpack.c.l.b16 %v720
    %v1013 = vunpack.c.h.b16 %v720
    %v1014 = vunpack.c.l.b16 %v721
    %v1015 = vunpack.c.l.b16 %v722
    %v1016 = vunpack.c.h.b16 %v722
    %v1017 = vunpack.c.l.b16 %v723
    %v1018 = vunpack.c.l.b16 %v724
    %v1019 = vunpack.c.h.b16 %v724
    %v1020 = vunpack.c.l.b16 %v725
    %v1021 = vunpack.c.l.b16 %v726
    %v1022 = vunpack.c.h.b16 %v726
    %v1023 = vunpack.c.l.b16 %v727
    %v1024 = vunpack.c.l.b16 %v728
    %v1025 = vunpack.c.h.b16 %v728
    %v1026 = vunpack.c.l.b16 %v729
    %v1027 = vunpack.c.l.b16 %v730
    %v1028 = vunpack.c.h.b16 %v730
    %v1029 = vunpack.c.l.b16 %v731
    %v1030 = vunpack.c.l.b16 %v732
    %v1031 = vunpack.c.h.b16 %v732
    %v1032 = vunpack.c.l.b16 %v733
    %v1033 = vunpack.c.l.b16 %v734
    %v1034 = vunpack.c.h.b16 %v734
    %v1035 = vunpack.c.l.b16 %v735
    %v1036 = vunpack.c.l.b16 %v736
    %v1037 = vunpack.c.h.b16 %v736
    %v1038 = vunpack.c.l.b16 %v737
    %v1039 = vunpack.c.l.b16 %v738
    %v1040 = vunpack.c.h.b16 %v738
    %v1041 = vunpack.c.l.b16 %v739
    %v1042 = vunpack.c.l.b16 %v740
    %v1043 = vunpack.c.h.b16 %v740
    %v1044 = vunpack.c.l.b16 %v741
    %v1045 = vunpack.c.l.b16 %v742
    %v1046 = vunpack.c.h.b16 %v742
    %v1047 = vunpack.c.l.b16 %v743
    %v1048 = vunpack.c.l.b16 %v744
    %v1049 = vunpack.c.h.b16 %v744
    %v1050 = vunpack.c.l.b16 %v745
    %v1051 = vunpack.c.l.b16 %v746
    %v1052 = vunpack.c.h.b16 %v746
    %v1053 = vunpack.c.l.b16 %v747
    %v1054 = vunpack.c.l.b16 %v748
    %v1055 = vunpack.c.h.b16 %v748
    %v1056 = vunpack.c.l.b16 %v749
    %v1057 = vunpack.c.l.b16 %v750
    %v1058 = vunpack.c.h.b16 %v750
    %v1059 = vunpack.c.l.b16 %v751
    %v1060 = vunpack.c.l.b16 %v752
    %v1061 = vunpack.c.h.b16 %v752
    %v1062 = vunpack.c.l.b16 %v753
    %v1063 = vunpack.c.l.b16 %v754
    %v1064 = vunpack.c.h.b16 %v754
    %v1065 = vunpack.c.l.b16 %v755
    %v1066 = vunpack.c.l.b16 %v756
    %v1067 = vunpack.c.h.b16 %v756
    %v1068 = vunpack.c.l.b16 %v757
    %v1069 = vunpack.c.l.b16 %v758
    %v1070 = vunpack.c.h.b16 %v758
    %v1071 = vunpack.c.l.b16 %v759
    %v1072 = vunpack.c.l.b16 %v760
    %v1073 = vunpack.c.h.b16 %v760
    %v1074 = vunpack.c.l.b16 %v761
    %v1075 = vunpack.c.l.b16 %v762
    %v1076 = vunpack.c.h.b16 %v762
    %v1077 = vunpack.c.l.b16 %v763
    %v1078 = vunpack.c.l.b16 %v764
    %v1079 = vunpack.c.h.b16 %v764
    %v1080 = vunpack.c.l.b16 %v765
    %v1081 = vunpack.c.l.b16 %v766
    %v1082 = vunpack.c.h.b16 %v766
    %v1083 = vunpack.c.l.b16 %v767
    %v1084 = vunpack.c.l.b16 %v768
    %v1085 = vunpack.c.h.b16 %v768
    %v1086 = vunpack.c.l.b16 %v769
    %v1087 = vunpack.c.l.b16 %v770
    %v1088 = vunpack.c.h.b16 %v770
    %v1089 = vunpack.c.l.b16 %v771
    %v1090 = vunpack.c.l.b16 %v772
    %v1091 = vunpack.c.h.b16 %v772
    %v1092 = vunpack.c.l.b16 %v773
    %v1093 = vunpack.c.l.b16 %v774
    %v1094 = vunpack.c.h.b16 %v774
    %v1095 = vunpack.c.l.b16 %v775
    %v1096 = vunpack.c.l.b16 %v776
    %v1097 = vunpack.c.h.b16 %v776
    %v1098 = vunpack.c.l.b16 %v777
    %v1099 = vunpack.c.l.b16 %v778
    %v1100 = vunpack.c.h.b16 %v778
    %v1101 = vunpack.c.l.b16 %v779
    %v1102 = vunpack.c.l.b16 %v780
    %v1103 = vunpack.c.h.b16 %v780
    %v1104 = vunpack.c.l.b16 %v781
    %v1105 = vunpack.c.l.b16 %v782
    %v1106 = vunpack.c.h.b16 %v782
    %v1107 = vunpack.c.l.b16 %v783
    %v1108 = vunpack.c.l.b16 %v784
    %v1109 = vunpack.c.h.b16 %v784
    %v1110 = vunpack.c.l.b16 %v785
    %v1111 = vunpack.c.l.b16 %v786
    %v1112 = vunpack.c.h.b16 %v786
    %v1113 = vunpack.c.l.b16 %v787
    %v1114 = vunpack.c.l.b16 %v788
    %v1115 = vunpack.c.h.b16 %v788
    %v1116 = vunpack.c.l.b16 %v789
    %v1117 = vunpack.c.l.b16 %v790
    %v1118 = vunpack.c.h.b16 %v790
    %v1119 = vunpack.c.l.b16 %v791
    %v1120 = vunpack.c.l.b16 %v792
    %v1121 = vunpack.c.h.b16 %v792
    %v1122 = vunpack.c.l.b16 %v793
    %v1123 = vunpack.c.l.b16 %v794
    %v1124 = vunpack.c.h.b16 %v794
    %v1125 = vunpack.c.l.b16 %v795
    %v1126 = vunpack.c.l.b16 %v796
    %v1127 = vunpack.c.h.b16 %v796
    %v1128 = vunpack.c.l.b16 %v797
    %v1129 = vunpack.c.l.b16 %v798
    %v1130 = vunpack.c.h.b16 %v798
    %v1131 = vunpack.c.l.b16 %v799
    %v1132 = vunpack.c.l.b16 %v800
    %v1133 = vunpack.c.h.b16 %v800
    %v1134 = vunpack.c.l.b16 %v801
    %v1135 = vunpack.c.l.b16 %v802
    %v1136 = vunpack.c.h.b16 %v802
    %v1137 = vunpack.c.l.b16 %v803
    %v1138 = vunpack.c.l.b16 %v804
    %v1139 = vunpack.c.h.b16 %v804
    %v1140 = vunpack.c.l.b16 %v805
    %v1141 = vunpack.c.l.b16 %v806
    %v1142 = vunpack.c.h.b16 %v806
    %v1143 = vunpack.c.l.b16 %v807
    %v1144 = vunpack.c.l.b16 %v808
    %v1145 = vunpack.c.h.b16 %v808
    %v1146 = vunpack.c.l.b16 %v809
    %v1147 = vpack.c.b16 %v958, %v955
    %v1148 = vpack.c.b16 %v959, %v956
    %v1149 = vpack.c.b16 %v960, %v957
    %v1150 = vpack.c.b16 %v964, %v961
    %v1151 = vpack.c.b16 %v965, %v962
    %v1152 = vpack.c.b16 %v966, %v963
    %v1153 = vpack.c.b16 %v970, %v967
    %v1154 = vpack.c.b16 %v971, %v968
    %v1155 = vpack.c.b16 %v972, %v969
    %v1156 = vpack.c.b16 %v976, %v973
    %v1157 = vpack.c.b16 %v977, %v974
    %v1158 = vpack.c.b16 %v978, %v975
    %v1159 = vpack.c.b16 %v982, %v979
    %v1160 = vpack.c.b16 %v983, %v980
    %v1161 = vpack.c.b16 %v984, %v981
    %v1162 = vpack.c.b16 %v988, %v985
    %v1163 = vpack.c.b16 %v989, %v986
    %v1164 = vpack.c.b16 %v990, %v987
    %v1165 = vpack.c.b16 %v994, %v991
    %v1166 = vpack.c.b16 %v995, %v992
    %v1167 = vpack.c.b16 %v996, %v993
    %v1168 = vpack.c.b16 %v1000, %v997
    %v1169 = vpack.c.b16 %v1001, %v998
    %v1170 = vpack.c.b16 %v1002, %v999
    %v1171 = vpack.c.b16 %v1006, %v1003
    %v1172 = vpack.c.b16 %v1007, %v1004
    %v1173 = vpack.c.b16 %v1008, %v1005
    %v1174 = vpack.c.b16 %v1012, %v1009
    %v1175 = vpack.c.b16 %v1013, %v1010
    %v1176 = vpack.c.b16 %v1014, %v1011
    %v1177 = vpack.c.b16 %v1018, %v1015
    %v1178 = vpack.c.b16 %v1019, %v1016
    %v1179 = vpack.c.b16 %v1020, %v1017
    %v1180 = vpack.c.b16 %v1024, %v1021
    %v1181 = vpack.c.b16 %v1025, %v1022
    %v1182 = vpack.c.b16 %v1026, %v1023
    %v1183 = vpack.c.b16 %v1030, %v1027
    %v1184 = vpack.c.b16 %v1031, %v1028
    %v1185 = vpack.c.b16 %v1032, %v1029
    %v1186 = vpack.c.b16 %v1036, %v1033
    %v1187 = vpack.c.b16 %v1037, %v1034
    %v1188 = vpack.c.b16 %v1038, %v1035
    %v1189 = vpack.c.b16 %v1042, %v1039
    %v1190 = vpack.c.b16 %v1043, %v1040
    %v1191 = vpack.c.b16 %v1044, %v1041
    %v1192 = vpack.c.b16 %v1048, %v1045
    %v1193 = vpack.c.b16 %v1049, %v1046
    %v1194 = vpack.c.b16 %v1050, %v1047
    %v1195 = vpack.c.b16 %v1054, %v1051
    %v1196 = vpack.c.b16 %v1055, %v1052
    %v1197 = vpack.c.b16 %v1056, %v1053
    %v1198 = vpack.c.b16 %v1060, %v1057
    %v1199 = vpack.c.b16 %v1061, %v1058
    %v1200 = vpack.c.b16 %v1062, %v1059
    %v1201 = vpack.c.b16 %v1066, %v1063
    %v1202 = vpack.c.b16 %v1067, %v1064
    %v1203 = vpack.c.b16 %v1068, %v1065
    %v1204 = vpack.c.b16 %v1072, %v1069
    %v1205 = vpack.c.b16 %v1073, %v1070
    %v1206 = vpack.c.b16 %v1074, %v1071
    %v1207 = vpack.c.b16 %v1078, %v1075
    %v1208 = vpack.c.b16 %v1079, %v1076
    %v1209 = vpack.c.b16 %v1080, %v1077
    %v1210 = vpack.c.b16 %v1084, %v1081
    %v1211 = vpack.c.b16 %v1085, %v1082
    %v1212 = vpack.c.b16 %v1086, %v1083
    %v1213 = vpack.c.b16 %v1090, %v1087
    %v1214 = vpack.c.b16 %v1091, %v1088
    %v1215 = vpack.c.b16 %v1092, %v1089
    %v1216 = vpack.c.b16 %v1096, %v1093
    %v1217 = vpack.c.b16 %v1097, %v1094
    %v1218 = vpack.c.b16 %v1098, %v1095
    %v1219 = vpack.c.b16 %v1102, %v1099
    %v1220 = vpack.c.b16 %v1103, %v1100
    %v1221 = vpack.c.b16 %v1104, %v1101
    %v1222 = vpack.c.b16 %v1108, %v1105
    %v1223 = vpack.c.b16 %v1109, %v1106
    %v1224 = vpack.c.b16 %v1110, %v1107
    %v1225 = vpack.c.b16 %v1114, %v1111
    %v1226 = vpack.c.b16 %v1115, %v1112
    %v1227 = vpack.c.b16 %v1116, %v1113
    %v1228 = vpack.c.b16 %v1120, %v1117
    %v1229 = vpack.c.b16 %v1121, %v1118
    %v1230 = vpack.c.b16 %v1122, %v1119
    %v1231 = vpack.c.b16 %v1126, %v1123
    %v1232 = vpack.c.b16 %v1127, %v1124
    %v1233 = vpack.c.b16 %v1128, %v1125
    %v1234 = vpack.c.b16 %v1132, %v1129
    %v1235 = vpack.c.b16 %v1133, %v1130
    %v1236 = vpack.c.b16 %v1134, %v1131
    %v1237 = vpack.c.b16 %v1138, %v1135
    %v1238 = vpack.c.b16 %v1139, %v1136
    %v1239 = vpack.c.b16 %v1140, %v1137
    %v1240 = vpack.c.b16 %v1144, %v1141
    %v1241 = vpack.c.b16 %v1145, %v1142
    %v1242 = vpack.c.b16 %v1146, %v1143
    %1339 = vmatprep.subr.bf16.mxu0 %v1148
    %1340 = vmatpush1.bf16.msra.mxu0 %v1147
    %1341 = vmatprep.subr.bf16.mxu0 %v1151
    %1342 = vmatpush1.bf16.msra.mxu0 %v1150
    %1343 = vmatprep.subr.bf16.mxu0 %v1154
    %1344 = vmatpush1.bf16.msra.mxu0 %v1153
    %1345 = vmatprep.subr.bf16.mxu0 %v1157
    %1346 = vmatpush1.bf16.msra.mxu0 %v1156
    %1347 = vmatprep.subr.bf16.mxu0 %v1160
    %1348 = vmatpush1.bf16.msra.mxu0 %v1159
    %1349 = vmatprep.subr.bf16.mxu0 %v1163
    %1350 = vmatpush1.bf16.msra.mxu0 %v1162
    %1351 = vmatprep.subr.bf16.mxu0 %v1166
    %1352 = vmatpush1.bf16.msra.mxu0 %v1165
    %1353 = vmatprep.subr.bf16.mxu0 %v1169
    %1354 = vmatpush1.bf16.msra.mxu0 %v1168
    %1355 = vmatprep.subr.bf16.mxu0 %v1172
    %1356 = vmatpush1.bf16.msra.mxu0 %v1171
    %1357 = vmatprep.subr.bf16.mxu0 %v1175
    %1358 = vmatpush1.bf16.msra.mxu0 %v1174
    %1359 = vmatprep.subr.bf16.mxu0 %v1178
    %1360 = vmatpush1.bf16.msra.mxu0 %v1177
    %1361 = vmatprep.subr.bf16.mxu0 %v1181
    %1362 = vmatpush1.bf16.msra.mxu0 %v1180
    %1363 = vmatprep.subr.bf16.mxu0 %v1184
    %1364 = vmatpush1.bf16.msra.mxu0 %v1183
    %1365 = vmatprep.subr.bf16.mxu0 %v1187
    %1366 = vmatpush1.bf16.msra.mxu0 %v1186
    %1367 = vmatprep.subr.bf16.mxu0 %v1190
    %1368 = vmatpush1.bf16.msra.mxu0 %v1189
    %1369 = vmatprep.subr.bf16.mxu0 %v1193
    %1370 = vmatpush1.bf16.msra.mxu0 %v1192
    %1371 = vmatprep.mubr.bf16.mxu0 %v675
    %1372 = vmatmul.mubr.bf16.gmra.mrb[0].mxu0 %v674
    %v1373 = vpop.f32.mrb[0].mxu0
    %v1374 = vadd.f32 %v815, %v1373
    %v1375 = vpop.f32.mrb[0].mxu0
    %v1376 = vadd.f32 %v819, %v1375
    %v1377 = vpop.f32.mrb[0].mxu0
    %v1378 = vpop.f32.mrb[0].mxu0
    %1379 = vdwg.mxu0
    %1380 = vmatprep.subr.bf16.mxu0 %v1196
    %1381 = vmatpush1.bf16.msra.mxu0 %v1195
    %1382 = vmatprep.subr.bf16.mxu0 %v1199
    %1383 = vmatpush1.bf16.msra.mxu0 %v1198
    %1384 = vmatprep.subr.bf16.mxu0 %v1202
    %1385 = vmatpush1.bf16.msra.mxu0 %v1201
    %1386 = vmatprep.subr.bf16.mxu0 %v1205
    %1387 = vmatpush1.bf16.msra.mxu0 %v1204
    %1388 = vmatprep.subr.bf16.mxu0 %v1208
    %1389 = vmatpush1.bf16.msra.mxu0 %v1207
    %1390 = vmatprep.subr.bf16.mxu0 %v1211
    %1391 = vmatpush1.bf16.msra.mxu0 %v1210
    %1392 = vmatprep.subr.bf16.mxu0 %v1214
    %1393 = vmatpush1.bf16.msra.mxu0 %v1213
    %1394 = vmatprep.subr.bf16.mxu0 %v1217
    %1395 = vmatpush1.bf16.msra.mxu0 %v1216
    %1396 = vmatprep.subr.bf16.mxu0 %v1220
    %1397 = vmatpush1.bf16.msra.mxu0 %v1219
    %1398 = vmatprep.subr.bf16.mxu0 %v1223
    %1399 = vmatpush1.bf16.msra.mxu0 %v1222
    %1400 = vmatprep.subr.bf16.mxu0 %v1226
    %1401 = vmatpush1.bf16.msra.mxu0 %v1225
    %1402 = vmatprep.subr.bf16.mxu0 %v1229
    %1403 = vmatpush1.bf16.msra.mxu0 %v1228
    %1404 = vmatprep.subr.bf16.mxu0 %v1232
    %1405 = vmatpush1.bf16.msra.mxu0 %v1231
    %1406 = vmatprep.subr.bf16.mxu0 %v1235
    %1407 = vmatpush1.bf16.msra.mxu0 %v1234
    %1408 = vmatprep.subr.bf16.mxu0 %v1238
    %1409 = vmatpush1.bf16.msra.mxu0 %v1237
    %1410 = vmatprep.subr.bf16.mxu0 %v1241
    %1411 = vmatpush1.bf16.msra.mxu0 %v1240
    %1412 = vmatprep.mubr.bf16.mxu0 %v677
    %1413 = vmatmul.mubr.bf16.gmra.mrb[0].mxu0 %v676
    %v1414 = vpop.f32.mrb[0].mxu0
    %v1415 = vadd.f32 %v1374, %v1414
    %v1416 = vpop.f32.mrb[0].mxu0
    %v1417 = vadd.f32 %v1376, %v1416
    %v1418 = vpop.f32.mrb[0].mxu0
    %v1419 = vpop.f32.mrb[0].mxu0
    %1420 = vdwg.mxu0
    %1421 = vmatprep.subr.bf16.mxu0 0
    %1422 = vmatpush1.bf16.msra.mxu0 %v1149
    %1423 = vmatprep.subr.bf16.mxu0 0
    %1424 = vmatpush1.bf16.msra.mxu0 %v1152
    %1425 = vmatprep.subr.bf16.mxu0 0
    %1426 = vmatpush1.bf16.msra.mxu0 %v1155
    %1427 = vmatprep.subr.bf16.mxu0 0
    %1428 = vmatpush1.bf16.msra.mxu0 %v1158
    %1429 = vmatprep.subr.bf16.mxu0 0
    %1430 = vmatpush1.bf16.msra.mxu0 %v1161
    %1431 = vmatprep.subr.bf16.mxu0 0
    %1432 = vmatpush1.bf16.msra.mxu0 %v1164
    %1433 = vmatprep.subr.bf16.mxu0 0
    %1434 = vmatpush1.bf16.msra.mxu0 %v1167
    %1435 = vmatprep.subr.bf16.mxu0 0
    %1436 = vmatpush1.bf16.msra.mxu0 %v1170
    %1437 = vmatprep.subr.bf16.mxu0 0
    %1438 = vmatpush1.bf16.msra.mxu0 %v1173
    %1439 = vmatprep.subr.bf16.mxu0 0
    %1440 = vmatpush1.bf16.msra.mxu0 %v1176
    %1441 = vmatprep.subr.bf16.mxu0 0
    %1442 = vmatpush1.bf16.msra.mxu0 %v1179
    %1443 = vmatprep.subr.bf16.mxu0 0
    %1444 = vmatpush1.bf16.msra.mxu0 %v1182
    %1445 = vmatprep.subr.bf16.mxu0 0
    %1446 = vmatpush1.bf16.msra.mxu0 %v1185
    %1447 = vmatprep.subr.bf16.mxu0 0
    %1448 = vmatpush1.bf16.msra.mxu0 %v1188
    %1449 = vmatprep.subr.bf16.mxu0 0
    %1450 = vmatpush1.bf16.msra.mxu0 %v1191
    %1451 = vmatprep.subr.bf16.mxu0 0
    %1452 = vmatpush1.bf16.msra.mxu0 %v1194
    %1453 = vmatprep.mubr.bf16.mxu0 %v675
    %1454 = vmatmul.mubr.bf16.gmra.mrb[0].mxu0 %v674
    %v1455 = vpop.f32.mrb[0].mxu0
    %v1456 = vadd.f32 %v823, %v1455
    %v1457 = vpop.f32.mrb[0].mxu0
    %v1458 = vpop.f32.mrb[0].mxu0
    %v1459 = vpop.f32.mrb[0].mxu0
    %1460 = vdwg.mxu0
    %1461 = vmatprep.subr.bf16.mxu0 0
    %1462 = vmatpush1.bf16.msra.mxu0 %v1197
    %1463 = vmatprep.subr.bf16.mxu0 0
    %1464 = vmatpush1.bf16.msra.mxu0 %v1200
    %1465 = vmatprep.subr.bf16.mxu0 0
    %1466 = vmatpush1.bf16.msra.mxu0 %v1203
    %1467 = vmatprep.subr.bf16.mxu0 0
    %1468 = vmatpush1.bf16.msra.mxu0 %v1206
    %1469 = vmatprep.subr.bf16.mxu0 0
    %1470 = vmatpush1.bf16.msra.mxu0 %v1209
    %1471 = vmatprep.subr.bf16.mxu0 0
    %1472 = vmatpush1.bf16.msra.mxu0 %v1212
    %1473 = vmatprep.subr.bf16.mxu0 0
    %1474 = vmatpush1.bf16.msra.mxu0 %v1215
    %1475 = vmatprep.subr.bf16.mxu0 0
    %1476 = vmatpush1.bf16.msra.mxu0 %v1218
    %1477 = vmatprep.subr.bf16.mxu0 0
    %1478 = vmatpush1.bf16.msra.mxu0 %v1221
    %1479 = vmatprep.subr.bf16.mxu0 0
    %1480 = vmatpush1.bf16.msra.mxu0 %v1224
    %1481 = vmatprep.subr.bf16.mxu0 0
    %1482 = vmatpush1.bf16.msra.mxu0 %v1227
    %1483 = vmatprep.subr.bf16.mxu0 0
    %1484 = vmatpush1.bf16.msra.mxu0 %v1230
    %1485 = vmatprep.subr.bf16.mxu0 0
    %1486 = vmatpush1.bf16.msra.mxu0 %v1233
    %1487 = vmatprep.subr.bf16.mxu0 0
    %1488 = vmatpush1.bf16.msra.mxu0 %v1236
    %1489 = vmatprep.subr.bf16.mxu0 0
    %1490 = vmatpush1.bf16.msra.mxu0 %v1239
    %1491 = vmatprep.subr.bf16.mxu0 0
    %1492 = vmatpush1.bf16.msra.mxu0 %v1242
    %1493 = vmatprep.mubr.bf16.mxu0 %v677
    %1494 = vmatmul.mubr.bf16.gmra.mrb[0].mxu0 %v676
    %v1495 = vpop.f32.mrb[0].mxu0
    %v1496 = vadd.f32 %v1456, %v1495
    %v1497 = vpop.f32.mrb[0].mxu0
    %v1498 = vpop.f32.mrb[0].mxu0
    %v1499 = vpop.f32.mrb[0].mxu0
    %1500 = vdwg.mxu0
    %v1501 = vmax.f32 %v1415, 0.0
    %v1502 = vmax.f32 %v1417, 0.0
    %v1503 = vmax.f32 %v1496, 0.0
    %v1504 = vpack.c.bf16 %v1501, %v1501
    %v1505 = vpack.c.bf16 %v1502, %v1502
    %v1506 = vpack.c.bf16 %v1503, %v1503
    %s1507 = scalar_lea.vmem [#allocation7], 768
    %v1508 = vld [vmem:[%s1507] sm:$0xff]
    %v1509 = vld [vmem:[%s1507 + $0x8] sm:$0xf]
    %v1510 = vld [vmem:[%s1507 + $0xc] sm:$0xff]
    %v1511 = vld [vmem:[%s1507 + $0x14] sm:$0xf]
    %v1512 = vld [vmem:[%s1507 + $0x18] sm:$0xff]
    %v1513 = vld [vmem:[%s1507 + $0x20] sm:$0xf]
    %v1514 = vld [vmem:[%s1507 + $0x24] sm:$0xff]
    %v1515 = vld [vmem:[%s1507 + $0x2c] sm:$0xf]
    %v1516 = vld [vmem:[%s1507 + $0x30] sm:$0xff]
    %v1517 = vld [vmem:[%s1507 + $0x38] sm:$0xf]
    %v1518 = vld [vmem:[%s1507 + $0x3c] sm:$0xff]
    %v1519 = vld [vmem:[%s1507 + $0x44] sm:$0xf]
    %v1520 = vld [vmem:[%s1507 + $0x48] sm:$0xff]
    %v1521 = vld [vmem:[%s1507 + $0x50] sm:$0xf]
    %v1522 = vld [vmem:[%s1507 + $0x54] sm:$0xff]
    %v1523 = vld [vmem:[%s1507 + $0x5c] sm:$0xf]
    %v1524 = vld [vmem:[%s1507 + $0x60] sm:$0xff]
    %v1525 = vld [vmem:[%s1507 + $0x68] sm:$0xf]
    %v1526 = vld [vmem:[%s1507 + $0x6c] sm:$0xff]
    %v1527 = vld [vmem:[%s1507 + $0x74] sm:$0xf]
    %v1528 = vld [vmem:[%s1507 + $0x78] sm:$0xff]
    %v1529 = vld [vmem:[%s1507 + $0x80] sm:$0xf]
    %v1530 = vld [vmem:[%s1507 + $0x84] sm:$0xff]
    %v1531 = vld [vmem:[%s1507 + $0x8c] sm:$0xf]
    %v1532 = vld [vmem:[%s1507 + $0x90] sm:$0xff]
    %v1533 = vld [vmem:[%s1507 + $0x98] sm:$0xf]
    %v1534 = vld [vmem:[%s1507 + $0x9c] sm:$0xff]
    %v1535 = vld [vmem:[%s1507 + $0xa4] sm:$0xf]
    %v1536 = vld [vmem:[%s1507 + $0xa8] sm:$0xff]
    %v1537 = vld [vmem:[%s1507 + $0xb0] sm:$0xf]
    %v1538 = vld [vmem:[%s1507 + $0xb4] sm:$0xff]
    %v1539 = vld [vmem:[%s1507 + $0xbc] sm:$0xf]
    %v1540 = vld [vmem:[%s1507 + $0xc0] sm:$0xff]
    %v1541 = vld [vmem:[%s1507 + $0xc8] sm:$0xf]
    %v1542 = vld [vmem:[%s1507 + $0xcc] sm:$0xff]
    %v1543 = vld [vmem:[%s1507 + $0xd4] sm:$0xf]
    %v1544 = vld [vmem:[%s1507 + $0xd8] sm:$0xff]
    %v1545 = vld [vmem:[%s1507 + $0xe0] sm:$0xf]
    %v1546 = vld [vmem:[%s1507 + $0xe4] sm:$0xff]
    %v1547 = vld [vmem:[%s1507 + $0xec] sm:$0xf]
    %v1548 = vld [vmem:[%s1507 + $0xf0] sm:$0xff]
    %v1549 = vld [vmem:[%s1507 + $0xf8] sm:$0xf]
    %v1550 = vld [vmem:[%s1507 + $0xfc] sm:$0xff]
    %v1551 = vld [vmem:[%s1507 + $0x104] sm:$0xf]
    %v1552 = vld [vmem:[%s1507 + $0x108] sm:$0xff]
    %v1553 = vld [vmem:[%s1507 + $0x110] sm:$0xf]
    %v1554 = vld [vmem:[%s1507 + $0x114] sm:$0xff]
    %v1555 = vld [vmem:[%s1507 + $0x11c] sm:$0xf]
    %v1556 = vld [vmem:[%s1507 + $0x120] sm:$0xff]
    %v1557 = vld [vmem:[%s1507 + $0x128] sm:$0xf]
    %v1558 = vld [vmem:[%s1507 + $0x12c] sm:$0xff]
    %v1559 = vld [vmem:[%s1507 + $0x134] sm:$0xf]
    %v1560 = vld [vmem:[%s1507 + $0x138] sm:$0xff]
    %v1561 = vld [vmem:[%s1507 + $0x140] sm:$0xf]
    %v1562 = vld [vmem:[%s1507 + $0x144] sm:$0xff]
    %v1563 = vld [vmem:[%s1507 + $0x14c] sm:$0xf]
    %v1564 = vld [vmem:[%s1507 + $0x150] sm:$0xff]
    %v1565 = vld [vmem:[%s1507 + $0x158] sm:$0xf]
    %v1566 = vld [vmem:[%s1507 + $0x15c] sm:$0xff]
    %v1567 = vld [vmem:[%s1507 + $0x164] sm:$0xf]
    %v1568 = vld [vmem:[%s1507 + $0x168] sm:$0xff]
    %v1569 = vld [vmem:[%s1507 + $0x170] sm:$0xf]
    %v1570 = vld [vmem:[%s1507 + $0x174] sm:$0xff]
    %v1571 = vld [vmem:[%s1507 + $0x17c] sm:$0xf]
    %v1572 = vld [vmem:[%s1507 + $0x180] sm:$0xff]
    %v1573 = vld [vmem:[%s1507 + $0x188] sm:$0xf]
    %v1574 = vld [vmem:[%s1507 + $0x18c] sm:$0xff]
    %v1575 = vld [vmem:[%s1507 + $0x194] sm:$0xf]
    %v1576 = vld [vmem:[%s1507 + $0x198] sm:$0xff]
    %v1577 = vld [vmem:[%s1507 + $0x1a0] sm:$0xf]
    %v1578 = vld [vmem:[%s1507 + $0x1a4] sm:$0xff]
    %v1579 = vld [vmem:[%s1507 + $0x1ac] sm:$0xf]
    %v1580 = vld [vmem:[%s1507 + $0x1b0] sm:$0xff]
    %v1581 = vld [vmem:[%s1507 + $0x1b8] sm:$0xf]
    %v1582 = vld [vmem:[%s1507 + $0x1bc] sm:$0xff]
    %v1583 = vld [vmem:[%s1507 + $0x1c4] sm:$0xf]
    %v1584 = vld [vmem:[%s1507 + $0x1c8] sm:$0xff]
    %v1585 = vld [vmem:[%s1507 + $0x1d0] sm:$0xf]
    %v1586 = vld [vmem:[%s1507 + $0x1d4] sm:$0xff]
    %v1587 = vld [vmem:[%s1507 + $0x1dc] sm:$0xf]
    %v1588 = vld [vmem:[%s1507 + $0x1e0] sm:$0xff]
    %v1589 = vld [vmem:[%s1507 + $0x1e8] sm:$0xf]
    %v1590 = vld [vmem:[%s1507 + $0x1ec] sm:$0xff]
    %v1591 = vld [vmem:[%s1507 + $0x1f4] sm:$0xf]
    %v1592 = vld [vmem:[%s1507 + $0x1f8] sm:$0xff]
    %v1593 = vld [vmem:[%s1507 + $0x200] sm:$0xf]
    %v1594 = vld [vmem:[%s1507 + $0x204] sm:$0xff]
    %v1595 = vld [vmem:[%s1507 + $0x20c] sm:$0xf]
    %v1596 = vld [vmem:[%s1507 + $0x210] sm:$0xff]
    %v1597 = vld [vmem:[%s1507 + $0x218] sm:$0xf]
    %v1598 = vld [vmem:[%s1507 + $0x21c] sm:$0xff]
    %v1599 = vld [vmem:[%s1507 + $0x224] sm:$0xf]
    %v1600 = vld [vmem:[%s1507 + $0x228] sm:$0xff]
    %v1601 = vld [vmem:[%s1507 + $0x230] sm:$0xf]
    %v1602 = vld [vmem:[%s1507 + $0x234] sm:$0xff]
    %v1603 = vld [vmem:[%s1507 + $0x23c] sm:$0xf]
    %v1604 = vld [vmem:[%s1507 + $0x240] sm:$0xff]
    %v1605 = vld [vmem:[%s1507 + $0x248] sm:$0xf]
    %v1606 = vld [vmem:[%s1507 + $0x24c] sm:$0xff]
    %v1607 = vld [vmem:[%s1507 + $0x254] sm:$0xf]
    %v1608 = vld [vmem:[%s1507 + $0x258] sm:$0xff]
    %v1609 = vld [vmem:[%s1507 + $0x260] sm:$0xf]
    %v1610 = vld [vmem:[%s1507 + $0x264] sm:$0xff]
    %v1611 = vld [vmem:[%s1507 + $0x26c] sm:$0xf]
    %v1612 = vld [vmem:[%s1507 + $0x270] sm:$0xff]
    %v1613 = vld [vmem:[%s1507 + $0x278] sm:$0xf]
    %v1614 = vld [vmem:[%s1507 + $0x27c] sm:$0xff]
    %v1615 = vld [vmem:[%s1507 + $0x284] sm:$0xf]
    %v1616 = vld [vmem:[%s1507 + $0x288] sm:$0xff]
    %v1617 = vld [vmem:[%s1507 + $0x290] sm:$0xf]
    %v1618 = vld [vmem:[%s1507 + $0x294] sm:$0xff]
    %v1619 = vld [vmem:[%s1507 + $0x29c] sm:$0xf]
    %v1620 = vld [vmem:[%s1507 + $0x2a0] sm:$0xff]
    %v1621 = vld [vmem:[%s1507 + $0x2a8] sm:$0xf]
    %v1622 = vld [vmem:[%s1507 + $0x2ac] sm:$0xff]
    %v1623 = vld [vmem:[%s1507 + $0x2b4] sm:$0xf]
    %v1624 = vld [vmem:[%s1507 + $0x2b8] sm:$0xff]
    %v1625 = vld [vmem:[%s1507 + $0x2c0] sm:$0xf]
    %v1626 = vld [vmem:[%s1507 + $0x2c4] sm:$0xff]
    %v1627 = vld [vmem:[%s1507 + $0x2cc] sm:$0xf]
    %v1628 = vld [vmem:[%s1507 + $0x2d0] sm:$0xff]
    %v1629 = vld [vmem:[%s1507 + $0x2d8] sm:$0xf]
    %v1630 = vld [vmem:[%s1507 + $0x2dc] sm:$0xff]
    %v1631 = vld [vmem:[%s1507 + $0x2e4] sm:$0xf]
    %v1632 = vld [vmem:[%s1507 + $0x2e8] sm:$0xff]
    %v1633 = vld [vmem:[%s1507 + $0x2f0] sm:$0xf]
    %v1634 = vld [vmem:[%s1507 + $0x2f4] sm:$0xff]
    %v1635 = vld [vmem:[%s1507 + $0x2fc] sm:$0xf]
    %v1636 = vld [vmem:[%s4 + $0xb] sm:$0x7]
    %v1638 = vlaneseq
    %v1639 = vshrl.u32 %v1638, 7
    %v1640 = vsub.s32 0, %v1639
    %v1641 = vrot.slane %v1636, %v1640
    %v1642 = vlaneseq
    %v1643 = vshrl.u32 %v1642, 7
    %v1644 = vsub.s32 1, %v1643
    %v1645 = vrot.slane %v1636, %v1644
    %v1646 = vlaneseq
    %v1647 = vshrl.u32 %v1646, 7
    %v1648 = vsub.s32 2, %v1647
    %v1649 = vrot.slane %v1636, %v1648
    %v1781 = vunpack.c.l.b16 %v1508
    %v1782 = vunpack.c.h.b16 %v1508
    %v1783 = vunpack.c.l.b16 %v1509
    %v1784 = vunpack.c.l.b16 %v1510
    %v1785 = vunpack.c.h.b16 %v1510
    %v1786 = vunpack.c.l.b16 %v1511
    %v1787 = vunpack.c.l.b16 %v1512
    %v1788 = vunpack.c.h.b16 %v1512
    %v1789 = vunpack.c.l.b16 %v1513
    %v1790 = vunpack.c.l.b16 %v1514
    %v1791 = vunpack.c.h.b16 %v1514
    %v1792 = vunpack.c.l.b16 %v1515
    %v1793 = vunpack.c.l.b16 %v1516
    %v1794 = vunpack.c.h.b16 %v1516
    %v1795 = vunpack.c.l.b16 %v1517
    %v1796 = vunpack.c.l.b16 %v1518
    %v1797 = vunpack.c.h.b16 %v1518
    %v1798 = vunpack.c.l.b16 %v1519
    %v1799 = vunpack.c.l.b16 %v1520
    %v1800 = vunpack.c.h.b16 %v1520
    %v1801 = vunpack.c.l.b16 %v1521
    %v1802 = vunpack.c.l.b16 %v1522
    %v1803 = vunpack.c.h.b16 %v1522
    %v1804 = vunpack.c.l.b16 %v1523
    %v1805 = vunpack.c.l.b16 %v1524
    %v1806 = vunpack.c.h.b16 %v1524
    %v1807 = vunpack.c.l.b16 %v1525
    %v1808 = vunpack.c.l.b16 %v1526
    %v1809 = vunpack.c.h.b16 %v1526
    %v1810 = vunpack.c.l.b16 %v1527
    %v1811 = vunpack.c.l.b16 %v1528
    %v1812 = vunpack.c.h.b16 %v1528
    %v1813 = vunpack.c.l.b16 %v1529
    %v1814 = vunpack.c.l.b16 %v1530
    %v1815 = vunpack.c.h.b16 %v1530
    %v1816 = vunpack.c.l.b16 %v1531
    %v1817 = vunpack.c.l.b16 %v1532
    %v1818 = vunpack.c.h.b16 %v1532
    %v1819 = vunpack.c.l.b16 %v1533
    %v1820 = vunpack.c.l.b16 %v1534
    %v1821 = vunpack.c.h.b16 %v1534
    %v1822 = vunpack.c.l.b16 %v1535
    %v1823 = vunpack.c.l.b16 %v1536
    %v1824 = vunpack.c.h.b16 %v1536
    %v1825 = vunpack.c.l.b16 %v1537
    %v1826 = vunpack.c.l.b16 %v1538
    %v1827 = vunpack.c.h.b16 %v1538
    %v1828 = vunpack.c.l.b16 %v1539
    %v1829 = vunpack.c.l.b16 %v1540
    %v1830 = vunpack.c.h.b16 %v1540
    %v1831 = vunpack.c.l.b16 %v1541
    %v1832 = vunpack.c.l.b16 %v1542
    %v1833 = vunpack.c.h.b16 %v1542
    %v1834 = vunpack.c.l.b16 %v1543
    %v1835 = vunpack.c.l.b16 %v1544
    %v1836 = vunpack.c.h.b16 %v1544
    %v1837 = vunpack.c.l.b16 %v1545
    %v1838 = vunpack.c.l.b16 %v1546
    %v1839 = vunpack.c.h.b16 %v1546
    %v1840 = vunpack.c.l.b16 %v1547
    %v1841 = vunpack.c.l.b16 %v1548
    %v1842 = vunpack.c.h.b16 %v1548
    %v1843 = vunpack.c.l.b16 %v1549
    %v1844 = vunpack.c.l.b16 %v1550
    %v1845 = vunpack.c.h.b16 %v1550
    %v1846 = vunpack.c.l.b16 %v1551
    %v1847 = vunpack.c.l.b16 %v1552
    %v1848 = vunpack.c.h.b16 %v1552
    %v1849 = vunpack.c.l.b16 %v1553
    %v1850 = vunpack.c.l.b16 %v1554
    %v1851 = vunpack.c.h.b16 %v1554
    %v1852 = vunpack.c.l.b16 %v1555
    %v1853 = vunpack.c.l.b16 %v1556
    %v1854 = vunpack.c.h.b16 %v1556
    %v1855 = vunpack.c.l.b16 %v1557
    %v1856 = vunpack.c.l.b16 %v1558
    %v1857 = vunpack.c.h.b16 %v1558
    %v1858 = vunpack.c.l.b16 %v1559
    %v1859 = vunpack.c.l.b16 %v1560
    %v1860 = vunpack.c.h.b16 %v1560
    %v1861 = vunpack.c.l.b16 %v1561
    %v1862 = vunpack.c.l.b16 %v1562
    %v1863 = vunpack.c.h.b16 %v1562
    %v1864 = vunpack.c.l.b16 %v1563
    %v1865 = vunpack.c.l.b16 %v1564
    %v1866 = vunpack.c.h.b16 %v1564
    %v1867 = vunpack.c.l.b16 %v1565
    %v1868 = vunpack.c.l.b16 %v1566
    %v1869 = vunpack.c.h.b16 %v1566
    %v1870 = vunpack.c.l.b16 %v1567
    %v1871 = vunpack.c.l.b16 %v1568
    %v1872 = vunpack.c.h.b16 %v1568
    %v1873 = vunpack.c.l.b16 %v1569
    %v1874 = vunpack.c.l.b16 %v1570
    %v1875 = vunpack.c.h.b16 %v1570
    %v1876 = vunpack.c.l.b16 %v1571
    %v1877 = vunpack.c.l.b16 %v1572
    %v1878 = vunpack.c.h.b16 %v1572
    %v1879 = vunpack.c.l.b16 %v1573
    %v1880 = vunpack.c.l.b16 %v1574
    %v1881 = vunpack.c.h.b16 %v1574
    %v1882 = vunpack.c.l.b16 %v1575
    %v1883 = vunpack.c.l.b16 %v1576
    %v1884 = vunpack.c.h.b16 %v1576
    %v1885 = vunpack.c.l.b16 %v1577
    %v1886 = vunpack.c.l.b16 %v1578
    %v1887 = vunpack.c.h.b16 %v1578
    %v1888 = vunpack.c.l.b16 %v1579
    %v1889 = vunpack.c.l.b16 %v1580
    %v1890 = vunpack.c.h.b16 %v1580
    %v1891 = vunpack.c.l.b16 %v1581
    %v1892 = vunpack.c.l.b16 %v1582
    %v1893 = vunpack.c.h.b16 %v1582
    %v1894 = vunpack.c.l.b16 %v1583
    %v1895 = vunpack.c.l.b16 %v1584
    %v1896 = vunpack.c.h.b16 %v1584
    %v1897 = vunpack.c.l.b16 %v1585
    %v1898 = vunpack.c.l.b16 %v1586
    %v1899 = vunpack.c.h.b16 %v1586
    %v1900 = vunpack.c.l.b16 %v1587
    %v1901 = vunpack.c.l.b16 %v1588
    %v1902 = vunpack.c.h.b16 %v1588
    %v1903 = vunpack.c.l.b16 %v1589
    %v1904 = vunpack.c.l.b16 %v1590
    %v1905 = vunpack.c.h.b16 %v1590
    %v1906 = vunpack.c.l.b16 %v1591
    %v1907 = vunpack.c.l.b16 %v1592
    %v1908 = vunpack.c.h.b16 %v1592
    %v1909 = vunpack.c.l.b16 %v1593
    %v1910 = vunpack.c.l.b16 %v1594
    %v1911 = vunpack.c.h.b16 %v1594
    %v1912 = vunpack.c.l.b16 %v1595
    %v1913 = vunpack.c.l.b16 %v1596
    %v1914 = vunpack.c.h.b16 %v1596
    %v1915 = vunpack.c.l.b16 %v1597
    %v1916 = vunpack.c.l.b16 %v1598
    %v1917 = vunpack.c.h.b16 %v1598
    %v1918 = vunpack.c.l.b16 %v1599
    %v1919 = vunpack.c.l.b16 %v1600
    %v1920 = vunpack.c.h.b16 %v1600
    %v1921 = vunpack.c.l.b16 %v1601
    %v1922 = vunpack.c.l.b16 %v1602
    %v1923 = vunpack.c.h.b16 %v1602
    %v1924 = vunpack.c.l.b16 %v1603
    %v1925 = vunpack.c.l.b16 %v1604
    %v1926 = vunpack.c.h.b16 %v1604
    %v1927 = vunpack.c.l.b16 %v1605
    %v1928 = vunpack.c.l.b16 %v1606
    %v1929 = vunpack.c.h.b16 %v1606
    %v1930 = vunpack.c.l.b16 %v1607
    %v1931 = vunpack.c.l.b16 %v1608
    %v1932 = vunpack.c.h.b16 %v1608
    %v1933 = vunpack.c.l.b16 %v1609
    %v1934 = vunpack.c.l.b16 %v1610
    %v1935 = vunpack.c.h.b16 %v1610
    %v1936 = vunpack.c.l.b16 %v1611
    %v1937 = vunpack.c.l.b16 %v1612
    %v1938 = vunpack.c.h.b16 %v1612
    %v1939 = vunpack.c.l.b16 %v1613
    %v1940 = vunpack.c.l.b16 %v1614
    %v1941 = vunpack.c.h.b16 %v1614
    %v1942 = vunpack.c.l.b16 %v1615
    %v1943 = vunpack.c.l.b16 %v1616
    %v1944 = vunpack.c.h.b16 %v1616
    %v1945 = vunpack.c.l.b16 %v1617
    %v1946 = vunpack.c.l.b16 %v1618
    %v1947 = vunpack.c.h.b16 %v1618
    %v1948 = vunpack.c.l.b16 %v1619
    %v1949 = vunpack.c.l.b16 %v1620
    %v1950 = vunpack.c.h.b16 %v1620
    %v1951 = vunpack.c.l.b16 %v1621
    %v1952 = vunpack.c.l.b16 %v1622
    %v1953 = vunpack.c.h.b16 %v1622
    %v1954 = vunpack.c.l.b16 %v1623
    %v1955 = vunpack.c.l.b16 %v1624
    %v1956 = vunpack.c.h.b16 %v1624
    %v1957 = vunpack.c.l.b16 %v1625
    %v1958 = vunpack.c.l.b16 %v1626
    %v1959 = vunpack.c.h.b16 %v1626
    %v1960 = vunpack.c.l.b16 %v1627
    %v1961 = vunpack.c.l.b16 %v1628
    %v1962 = vunpack.c.h.b16 %v1628
    %v1963 = vunpack.c.l.b16 %v1629
    %v1964 = vunpack.c.l.b16 %v1630
    %v1965 = vunpack.c.h.b16 %v1630
    %v1966 = vunpack.c.l.b16 %v1631
    %v1967 = vunpack.c.l.b16 %v1632
    %v1968 = vunpack.c.h.b16 %v1632
    %v1969 = vunpack.c.l.b16 %v1633
    %v1970 = vunpack.c.l.b16 %v1634
    %v1971 = vunpack.c.h.b16 %v1634
    %v1972 = vunpack.c.l.b16 %v1635
    %v1973 = vpack.c.b16 %v1784, %v1781
    %v1974 = vpack.c.b16 %v1785, %v1782
    %v1975 = vpack.c.b16 %v1786, %v1783
    %v1976 = vpack.c.b16 %v1790, %v1787
    %v1977 = vpack.c.b16 %v1791, %v1788
    %v1978 = vpack.c.b16 %v1792, %v1789
    %v1979 = vpack.c.b16 %v1796, %v1793
    %v1980 = vpack.c.b16 %v1797, %v1794
    %v1981 = vpack.c.b16 %v1798, %v1795
    %v1982 = vpack.c.b16 %v1802, %v1799
    %v1983 = vpack.c.b16 %v1803, %v1800
    %v1984 = vpack.c.b16 %v1804, %v1801
    %v1985 = vpack.c.b16 %v1808, %v1805
    %v1986 = vpack.c.b16 %v1809, %v1806
    %v1987 = vpack.c.b16 %v1810, %v1807
    %v1988 = vpack.c.b16 %v1814, %v1811
    %v1989 = vpack.c.b16 %v1815, %v1812
    %v1990 = vpack.c.b16 %v1816, %v1813
    %v1991 = vpack.c.b16 %v1820, %v1817
    %v1992 = vpack.c.b16 %v1821, %v1818
    %v1993 = vpack.c.b16 %v1822, %v1819
    %v1994 = vpack.c.b16 %v1826, %v1823
    %v1995 = vpack.c.b16 %v1827, %v1824
    %v1996 = vpack.c.b16 %v1828, %v1825
    %v1997 = vpack.c.b16 %v1832, %v1829
    %v1998 = vpack.c.b16 %v1833, %v1830
    %v1999 = vpack.c.b16 %v1834, %v1831
    %v2000 = vpack.c.b16 %v1838, %v1835
    %v2001 = vpack.c.b16 %v1839, %v1836
    %v2002 = vpack.c.b16 %v1840, %v1837
    %v2003 = vpack.c.b16 %v1844, %v1841
    %v2004 = vpack.c.b16 %v1845, %v1842
    %v2005 = vpack.c.b16 %v1846, %v1843
    %v2006 = vpack.c.b16 %v1850, %v1847
    %v2007 = vpack.c.b16 %v1851, %v1848
    %v2008 = vpack.c.b16 %v1852, %v1849
    %v2009 = vpack.c.b16 %v1856, %v1853
    %v2010 = vpack.c.b16 %v1857, %v1854
    %v2011 = vpack.c.b16 %v1858, %v1855
    %v2012 = vpack.c.b16 %v1862, %v1859
    %v2013 = vpack.c.b16 %v1863, %v1860
    %v2014 = vpack.c.b16 %v1864, %v1861
    %v2015 = vpack.c.b16 %v1868, %v1865
    %v2016 = vpack.c.b16 %v1869, %v1866
    %v2017 = vpack.c.b16 %v1870, %v1867
    %v2018 = vpack.c.b16 %v1874, %v1871
    %v2019 = vpack.c.b16 %v1875, %v1872
    %v2020 = vpack.c.b16 %v1876, %v1873
    %v2021 = vpack.c.b16 %v1880, %v1877
    %v2022 = vpack.c.b16 %v1881, %v1878
    %v2023 = vpack.c.b16 %v1882, %v1879
    %v2024 = vpack.c.b16 %v1886, %v1883
    %v2025 = vpack.c.b16 %v1887, %v1884
    %v2026 = vpack.c.b16 %v1888, %v1885
    %v2027 = vpack.c.b16 %v1892, %v1889
    %v2028 = vpack.c.b16 %v1893, %v1890
    %v2029 = vpack.c.b16 %v1894, %v1891
    %v2030 = vpack.c.b16 %v1898, %v1895
    %v2031 = vpack.c.b16 %v1899, %v1896
    %v2032 = vpack.c.b16 %v1900, %v1897
    %v2033 = vpack.c.b16 %v1904, %v1901
    %v2034 = vpack.c.b16 %v1905, %v1902
    %v2035 = vpack.c.b16 %v1906, %v1903
    %v2036 = vpack.c.b16 %v1910, %v1907
    %v2037 = vpack.c.b16 %v1911, %v1908
    %v2038 = vpack.c.b16 %v1912, %v1909
    %v2039 = vpack.c.b16 %v1916, %v1913
    %v2040 = vpack.c.b16 %v1917, %v1914
    %v2041 = vpack.c.b16 %v1918, %v1915
    %v2042 = vpack.c.b16 %v1922, %v1919
    %v2043 = vpack.c.b16 %v1923, %v1920
    %v2044 = vpack.c.b16 %v1924, %v1921
    %v2045 = vpack.c.b16 %v1928, %v1925
    %v2046 = vpack.c.b16 %v1929, %v1926
    %v2047 = vpack.c.b16 %v1930, %v1927
    %v2048 = vpack.c.b16 %v1934, %v1931
    %v2049 = vpack.c.b16 %v1935, %v1932
    %v2050 = vpack.c.b16 %v1936, %v1933
    %v2051 = vpack.c.b16 %v1940, %v1937
    %v2052 = vpack.c.b16 %v1941, %v1938
    %v2053 = vpack.c.b16 %v1942, %v1939
    %v2054 = vpack.c.b16 %v1946, %v1943
    %v2055 = vpack.c.b16 %v1947, %v1944
    %v2056 = vpack.c.b16 %v1948, %v1945
    %v2057 = vpack.c.b16 %v1952, %v1949
    %v2058 = vpack.c.b16 %v1953, %v1950
    %v2059 = vpack.c.b16 %v1954, %v1951
    %v2060 = vpack.c.b16 %v1958, %v1955
    %v2061 = vpack.c.b16 %v1959, %v1956
    %v2062 = vpack.c.b16 %v1960, %v1957
    %v2063 = vpack.c.b16 %v1964, %v1961
    %v2064 = vpack.c.b16 %v1965, %v1962
    %v2065 = vpack.c.b16 %v1966, %v1963
    %v2066 = vpack.c.b16 %v1970, %v1967
    %v2067 = vpack.c.b16 %v1971, %v1968
    %v2068 = vpack.c.b16 %v1972, %v1969
    %2165 = vmatprep.subr.bf16.mxu0 %v1974
    %2166 = vmatpush1.bf16.msra.mxu0 %v1973
    %2167 = vmatprep.subr.bf16.mxu0 %v1977
    %2168 = vmatpush1.bf16.msra.mxu0 %v1976
    %2169 = vmatprep.subr.bf16.mxu0 %v1980
    %2170 = vmatpush1.bf16.msra.mxu0 %v1979
    %2171 = vmatprep.subr.bf16.mxu0 %v1983
    %2172 = vmatpush1.bf16.msra.mxu0 %v1982
    %2173 = vmatprep.subr.bf16.mxu0 %v1986
    %2174 = vmatpush1.bf16.msra.mxu0 %v1985
    %2175 = vmatprep.subr.bf16.mxu0 %v1989
    %2176 = vmatpush1.bf16.msra.mxu0 %v1988
    %2177 = vmatprep.subr.bf16.mxu0 %v1992
    %2178 = vmatpush1.bf16.msra.mxu0 %v1991
    %2179 = vmatprep.subr.bf16.mxu0 %v1995
    %2180 = vmatpush1.bf16.msra.mxu0 %v1994
    %2181 = vmatprep.subr.bf16.mxu0 %v1998
    %2182 = vmatpush1.bf16.msra.mxu0 %v1997
    %2183 = vmatprep.subr.bf16.mxu0 %v2001
    %2184 = vmatpush1.bf16.msra.mxu0 %v2000
    %2185 = vmatprep.subr.bf16.mxu0 %v2004
    %2186 = vmatpush1.bf16.msra.mxu0 %v2003
    %2187 = vmatprep.subr.bf16.mxu0 %v2007
    %2188 = vmatpush1.bf16.msra.mxu0 %v2006
    %2189 = vmatprep.subr.bf16.mxu0 %v2010
    %2190 = vmatpush1.bf16.msra.mxu0 %v2009
    %2191 = vmatprep.subr.bf16.mxu0 %v2013
    %2192 = vmatpush1.bf16.msra.mxu0 %v2012
    %2193 = vmatprep.subr.bf16.mxu0 %v2016
    %2194 = vmatpush1.bf16.msra.mxu0 %v2015
    %2195 = vmatprep.subr.bf16.mxu0 %v2019
    %2196 = vmatpush1.bf16.msra.mxu0 %v2018
    %2197 = vmatprep.mubr.bf16.mxu0 %v679
    %2198 = vmatmul.mubr.bf16.gmra.mrb[0].mxu0 %v678
    %v2199 = vpop.f32.mrb[0].mxu0
    %v2200 = vadd.f32 %v1641, %v2199
    %v2201 = vpop.f32.mrb[0].mxu0
    %v2202 = vadd.f32 %v1645, %v2201
    %v2203 = vpop.f32.mrb[0].mxu0
    %v2204 = vpop.f32.mrb[0].mxu0
    %2205 = vdwg.mxu0
    %2206 = vmatprep.subr.bf16.mxu0 %v2022
    %2207 = vmatpush1.bf16.msra.mxu0 %v2021
    %2208 = vmatprep.subr.bf16.mxu0 %v2025
    %2209 = vmatpush1.bf16.msra.mxu0 %v2024
    %2210 = vmatprep.subr.bf16.mxu0 %v2028
    %2211 = vmatpush1.bf16.msra.mxu0 %v2027
    %2212 = vmatprep.subr.bf16.mxu0 %v2031
    %2213 = vmatpush1.bf16.msra.mxu0 %v2030
    %2214 = vmatprep.subr.bf16.mxu0 %v2034
    %2215 = vmatpush1.bf16.msra.mxu0 %v2033
    %2216 = vmatprep.subr.bf16.mxu0 %v2037
    %2217 = vmatpush1.bf16.msra.mxu0 %v2036
    %2218 = vmatprep.subr.bf16.mxu0 %v2040
    %2219 = vmatpush1.bf16.msra.mxu0 %v2039
    %2220 = vmatprep.subr.bf16.mxu0 %v2043
    %2221 = vmatpush1.bf16.msra.mxu0 %v2042
    %2222 = vmatprep.subr.bf16.mxu0 %v2046
    %2223 = vmatpush1.bf16.msra.mxu0 %v2045
    %2224 = vmatprep.subr.bf16.mxu0 %v2049
    %2225 = vmatpush1.bf16.msra.mxu0 %v2048
    %2226 = vmatprep.subr.bf16.mxu0 %v2052
    %2227 = vmatpush1.bf16.msra.mxu0 %v2051
    %2228 = vmatprep.subr.bf16.mxu0 %v2055
    %2229 = vmatpush1.bf16.msra.mxu0 %v2054
    %2230 = vmatprep.subr.bf16.mxu0 %v2058
    %2231 = vmatpush1.bf16.msra.mxu0 %v2057
    %2232 = vmatprep.subr.bf16.mxu0 %v2061
    %2233 = vmatpush1.bf16.msra.mxu0 %v2060
    %2234 = vmatprep.subr.bf16.mxu0 %v2064
    %2235 = vmatpush1.bf16.msra.mxu0 %v2063
    %2236 = vmatprep.subr.bf16.mxu0 %v2067
    %2237 = vmatpush1.bf16.msra.mxu0 %v2066
    %2238 = vmatprep.mubr.bf16.mxu0 %v681
    %2239 = vmatmul.mubr.bf16.gmra.mrb[0].mxu0 %v680
    %v2240 = vpop.f32.mrb[0].mxu0
    %v2241 = vadd.f32 %v2200, %v2240
    %v2242 = vpop.f32.mrb[0].mxu0
    %v2243 = vadd.f32 %v2202, %v2242
    %v2244 = vpop.f32.mrb[0].mxu0
    %v2245 = vpop.f32.mrb[0].mxu0
    %2246 = vdwg.mxu0
    %2247 = vmatprep.subr.bf16.mxu0 0
    %2248 = vmatpush1.bf16.msra.mxu0 %v1975
    %2249 = vmatprep.subr.bf16.mxu0 0
    %2250 = vmatpush1.bf16.msra.mxu0 %v1978
    %2251 = vmatprep.subr.bf16.mxu0 0
    %2252 = vmatpush1.bf16.msra.mxu0 %v1981
    %2253 = vmatprep.subr.bf16.mxu0 0
    %2254 = vmatpush1.bf16.msra.mxu0 %v1984
    %2255 = vmatprep.subr.bf16.mxu0 0
    %2256 = vmatpush1.bf16.msra.mxu0 %v1987
    %2257 = vmatprep.subr.bf16.mxu0 0
    %2258 = vmatpush1.bf16.msra.mxu0 %v1990
    %2259 = vmatprep.subr.bf16.mxu0 0
    %2260 = vmatpush1.bf16.msra.mxu0 %v1993
    %2261 = vmatprep.subr.bf16.mxu0 0
    %2262 = vmatpush1.bf16.msra.mxu0 %v1996
    %2263 = vmatprep.subr.bf16.mxu0 0
    %2264 = vmatpush1.bf16.msra.mxu0 %v1999
    %2265 = vmatprep.subr.bf16.mxu0 0
    %2266 = vmatpush1.bf16.msra.mxu0 %v2002
    %2267 = vmatprep.subr.bf16.mxu0 0
    %2268 = vmatpush1.bf16.msra.mxu0 %v2005
    %2269 = vmatprep.subr.bf16.mxu0 0
    %2270 = vmatpush1.bf16.msra.mxu0 %v2008
    %2271 = vmatprep.subr.bf16.mxu0 0
    %2272 = vmatpush1.bf16.msra.mxu0 %v2011
    %2273 = vmatprep.subr.bf16.mxu0 0
    %2274 = vmatpush1.bf16.msra.mxu0 %v2014
    %2275 = vmatprep.subr.bf16.mxu0 0
    %2276 = vmatpush1.bf16.msra.mxu0 %v2017
    %2277 = vmatprep.subr.bf16.mxu0 0
    %2278 = vmatpush1.bf16.msra.mxu0 %v2020
    %2279 = vmatprep.mubr.bf16.mxu0 %v679
    %2280 = vmatmul.mubr.bf16.gmra.mrb[0].mxu0 %v678
    %v2281 = vpop.f32.mrb[0].mxu0
    %v2282 = vadd.f32 %v1649, %v2281
    %v2283 = vpop.f32.mrb[0].mxu0
    %v2284 = vpop.f32.mrb[0].mxu0
    %v2285 = vpop.f32.mrb[0].mxu0
    %2286 = vdwg.mxu0
    %2287 = vmatprep.subr.bf16.mxu0 0
    %2288 = vmatpush1.bf16.msra.mxu0 %v2023
    %2289 = vmatprep.subr.bf16.mxu0 0
    %2290 = vmatpush1.bf16.msra.mxu0 %v2026
    %2291 = vmatprep.subr.bf16.mxu0 0
    %2292 = vmatpush1.bf16.msra.mxu0 %v2029
    %2293 = vmatprep.subr.bf16.mxu0 0
    %2294 = vmatpush1.bf16.msra.mxu0 %v2032
    %2295 = vmatprep.subr.bf16.mxu0 0
    %2296 = vmatpush1.bf16.msra.mxu0 %v2035
    %2297 = vmatprep.subr.bf16.mxu0 0
    %2298 = vmatpush1.bf16.msra.mxu0 %v2038
    %2299 = vmatprep.subr.bf16.mxu0 0
    %2300 = vmatpush1.bf16.msra.mxu0 %v2041
    %2301 = vmatprep.subr.bf16.mxu0 0
    %2302 = vmatpush1.bf16.msra.mxu0 %v2044
    %2303 = vmatprep.subr.bf16.mxu0 0
    %2304 = vmatpush1.bf16.msra.mxu0 %v2047
    %2305 = vmatprep.subr.bf16.mxu0 0
    %2306 = vmatpush1.bf16.msra.mxu0 %v2050
    %2307 = vmatprep.subr.bf16.mxu0 0
    %2308 = vmatpush1.bf16.msra.mxu0 %v2053
    %2309 = vmatprep.subr.bf16.mxu0 0
    %2310 = vmatpush1.bf16.msra.mxu0 %v2056
    %2311 = vmatprep.subr.bf16.mxu0 0
    %2312 = vmatpush1.bf16.msra.mxu0 %v2059
    %2313 = vmatprep.subr.bf16.mxu0 0
    %2314 = vmatpush1.bf16.msra.mxu0 %v2062
    %2315 = vmatprep.subr.bf16.mxu0 0
    %2316 = vmatpush1.bf16.msra.mxu0 %v2065
    %2317 = vmatprep.subr.bf16.mxu0 0
    %2318 = vmatpush1.bf16.msra.mxu0 %v2068
    %2319 = vmatprep.mubr.bf16.mxu0 %v681
    %2320 = vmatmul.mubr.bf16.gmra.mrb[0].mxu0 %v680
    %v2321 = vpop.f32.mrb[0].mxu0
    %v2322 = vadd.f32 %v2282, %v2321
    %v2323 = vpop.f32.mrb[0].mxu0
    %v2324 = vpop.f32.mrb[0].mxu0
    %v2325 = vpop.f32.mrb[0].mxu0
    %2326 = vdwg.mxu0
    %v2327 = vmax.f32 %v2241, 0.0
    %v2328 = vmax.f32 %v2243, 0.0
    %v2329 = vmax.f32 %v2322, 0.0
    %v2330 = vpack.c.bf16 %v2327, %v2327
    %v2331 = vpack.c.bf16 %v2328, %v2328
    %v2332 = vpack.c.bf16 %v2329, %v2329
    %v2333 = vld [vmem:[#allocation8] sm:$0xf]
    %v2334 = vld [vmem:[#allocation8 + $0x4] sm:$0xf]
    %v2335 = vld [vmem:[#allocation8 + $0x8] sm:$0xf]
    %v2336 = vld [vmem:[#allocation8 + $0xc] sm:$0xf]
    %v2337 = vld [vmem:[#allocation8 + $0x10] sm:$0xf]
    %v2338 = vld [vmem:[#allocation8 + $0x14] sm:$0xf]
    %v2339 = vld [vmem:[#allocation8 + $0x18] sm:$0xf]
    %v2340 = vld [vmem:[#allocation8 + $0x1c] sm:$0xf]
    %v2341 = vld [vmem:[#allocation8 + $0x20] sm:$0xf]
    %v2342 = vld [vmem:[#allocation8 + $0x24] sm:$0xf]
    %v2343 = vld [vmem:[#allocation8 + $0x28] sm:$0xf]
    %v2344 = vld [vmem:[#allocation8 + $0x2c] sm:$0xf]
    %v2345 = vld [vmem:[#allocation8 + $0x30] sm:$0xf]
    %v2346 = vld [vmem:[#allocation8 + $0x34] sm:$0xf]
    %v2347 = vld [vmem:[#allocation8 + $0x38] sm:$0xf]
    %v2348 = vld [vmem:[#allocation8 + $0x3c] sm:$0xf]
    %v2349 = vld [vmem:[#allocation8 + $0x40] sm:$0xf]
    %v2350 = vld [vmem:[#allocation8 + $0x44] sm:$0xf]
    %v2351 = vld [vmem:[#allocation8 + $0x48] sm:$0xf]
    %v2352 = vld [vmem:[#allocation8 + $0x4c] sm:$0xf]
    %v2353 = vld [vmem:[#allocation8 + $0x50] sm:$0xf]
    %v2354 = vld [vmem:[#allocation8 + $0x54] sm:$0xf]
    %v2355 = vld [vmem:[#allocation8 + $0x58] sm:$0xf]
    %v2356 = vld [vmem:[#allocation8 + $0x5c] sm:$0xf]
    %v2357 = vld [vmem:[#allocation8 + $0x60] sm:$0xf]
    %v2358 = vld [vmem:[#allocation8 + $0x64] sm:$0xf]
    %v2359 = vld [vmem:[#allocation8 + $0x68] sm:$0xf]
    %v2360 = vld [vmem:[#allocation8 + $0x6c] sm:$0xf]
    %v2361 = vld [vmem:[#allocation8 + $0x70] sm:$0xf]
    %v2362 = vld [vmem:[#allocation8 + $0x74] sm:$0xf]
    %v2363 = vld [vmem:[#allocation8 + $0x78] sm:$0xf]
    %v2364 = vld [vmem:[#allocation8 + $0x7c] sm:$0xf]
    %v2365 = vld [vmem:[#allocation8 + $0x80] sm:$0xf]
    %v2366 = vld [vmem:[#allocation8 + $0x84] sm:$0xf]
    %v2367 = vld [vmem:[#allocation8 + $0x88] sm:$0xf]
    %v2368 = vld [vmem:[#allocation8 + $0x8c] sm:$0xf]
    %v2369 = vld [vmem:[#allocation8 + $0x90] sm:$0xf]
    %v2370 = vld [vmem:[#allocation8 + $0x94] sm:$0xf]
    %v2371 = vld [vmem:[#allocation8 + $0x98] sm:$0xf]
    %v2372 = vld [vmem:[#allocation8 + $0x9c] sm:$0xf]
    %v2373 = vld [vmem:[#allocation8 + $0xa0] sm:$0xf]
    %v2374 = vld [vmem:[#allocation8 + $0xa4] sm:$0xf]
    %v2375 = vld [vmem:[#allocation8 + $0xa8] sm:$0xf]
    %v2376 = vld [vmem:[#allocation8 + $0xac] sm:$0xf]
    %v2377 = vld [vmem:[#allocation8 + $0xb0] sm:$0xf]
    %v2378 = vld [vmem:[#allocation8 + $0xb4] sm:$0xf]
    %v2379 = vld [vmem:[#allocation8 + $0xb8] sm:$0xf]
    %v2380 = vld [vmem:[#allocation8 + $0xbc] sm:$0xf]
    %s2381 = scalar_lea.vmem [#allocation8], 192
    %v2382 = vld [vmem:[%s2381] sm:$0xf]
    %v2383 = vld [vmem:[%s2381 + $0x4] sm:$0xf]
    %v2384 = vld [vmem:[%s2381 + $0x8] sm:$0xf]
    %v2385 = vld [vmem:[%s2381 + $0xc] sm:$0xf]
    %v2386 = vld [vmem:[%s2381 + $0x10] sm:$0xf]
    %v2387 = vld [vmem:[%s2381 + $0x14] sm:$0xf]
    %v2388 = vld [vmem:[%s2381 + $0x18] sm:$0xf]
    %v2389 = vld [vmem:[%s2381 + $0x1c] sm:$0xf]
    %v2390 = vld [vmem:[%s2381 + $0x20] sm:$0xf]
    %v2391 = vld [vmem:[%s2381 + $0x24] sm:$0xf]
    %v2392 = vld [vmem:[%s2381 + $0x28] sm:$0xf]
    %v2393 = vld [vmem:[%s2381 + $0x2c] sm:$0xf]
    %v2394 = vld [vmem:[%s2381 + $0x30] sm:$0xf]
    %v2395 = vld [vmem:[%s2381 + $0x34] sm:$0xf]
    %v2396 = vld [vmem:[%s2381 + $0x38] sm:$0xf]
    %v2397 = vld [vmem:[%s2381 + $0x3c] sm:$0xf]
    %v2398 = vld [vmem:[%s2381 + $0x40] sm:$0xf]
    %v2399 = vld [vmem:[%s2381 + $0x44] sm:$0xf]
    %v2400 = vld [vmem:[%s2381 + $0x48] sm:$0xf]
    %v2401 = vld [vmem:[%s2381 + $0x4c] sm:$0xf]
    %v2402 = vld [vmem:[%s2381 + $0x50] sm:$0xf]
    %v2403 = vld [vmem:[%s2381 + $0x54] sm:$0xf]
    %v2404 = vld [vmem:[%s2381 + $0x58] sm:$0xf]
    %v2405 = vld [vmem:[%s2381 + $0x5c] sm:$0xf]
    %v2406 = vld [vmem:[%s2381 + $0x60] sm:$0xf]
    %v2407 = vld [vmem:[%s2381 + $0x64] sm:$0xf]
    %v2408 = vld [vmem:[%s2381 + $0x68] sm:$0xf]
    %v2409 = vld [vmem:[%s2381 + $0x6c] sm:$0xf]
    %v2410 = vld [vmem:[%s2381 + $0x70] sm:$0xf]
    %v2411 = vld [vmem:[%s2381 + $0x74] sm:$0xf]
    %v2412 = vld [vmem:[%s2381 + $0x78] sm:$0xf]
    %v2413 = vld [vmem:[%s2381 + $0x7c] sm:$0xf]
    %v2414 = vld [vmem:[%s2381 + $0x80] sm:$0xf]
    %v2415 = vld [vmem:[%s2381 + $0x84] sm:$0xf]
    %v2416 = vld [vmem:[%s2381 + $0x88] sm:$0xf]
    %v2417 = vld [vmem:[%s2381 + $0x8c] sm:$0xf]
    %v2418 = vld [vmem:[%s2381 + $0x90] sm:$0xf]
    %v2419 = vld [vmem:[%s2381 + $0x94] sm:$0xf]
    %v2420 = vld [vmem:[%s2381 + $0x98] sm:$0xf]
    %v2421 = vld [vmem:[%s2381 + $0x9c] sm:$0xf]
    %v2422 = vld [vmem:[%s2381 + $0xa0] sm:$0xf]
    %v2423 = vld [vmem:[%s2381 + $0xa4] sm:$0xf]
    %v2424 = vld [vmem:[%s2381 + $0xa8] sm:$0xf]
    %v2425 = vld [vmem:[%s2381 + $0xac] sm:$0xf]
    %v2426 = vld [vmem:[%s2381 + $0xb0] sm:$0xf]
    %v2427 = vld [vmem:[%s2381 + $0xb4] sm:$0xf]
    %v2428 = vld [vmem:[%s2381 + $0xb8] sm:$0xf]
    %v2429 = vld [vmem:[%s2381 + $0xbc] sm:$0xf]
    %v2478 = vunpack.c.l.b16 %v2382
    %v2479 = vunpack.c.l.b16 %v2383
    %v2480 = vunpack.c.l.b16 %v2384
    %v2481 = vunpack.c.l.b16 %v2385
    %v2482 = vunpack.c.l.b16 %v2386
    %v2483 = vunpack.c.l.b16 %v2387
    %v2484 = vunpack.c.l.b16 %v2388
    %v2485 = vunpack.c.l.b16 %v2389
    %v2486 = vunpack.c.l.b16 %v2390
    %v2487 = vunpack.c.l.b16 %v2391
    %v2488 = vunpack.c.l.b16 %v2392
    %v2489 = vunpack.c.l.b16 %v2393
    %v2490 = vunpack.c.l.b16 %v2394
    %v2491 = vunpack.c.l.b16 %v2395
    %v2492 = vunpack.c.l.b16 %v2396
    %v2493 = vunpack.c.l.b16 %v2397
    %v2494 = vunpack.c.l.b16 %v2398
    %v2495 = vunpack.c.l.b16 %v2399
    %v2496 = vunpack.c.l.b16 %v2400
    %v2497 = vunpack.c.l.b16 %v2401
    %v2498 = vunpack.c.l.b16 %v2402
    %v2499 = vunpack.c.l.b16 %v2403
    %v2500 = vunpack.c.l.b16 %v2404
    %v2501 = vunpack.c.l.b16 %v2405
    %v2502 = vunpack.c.l.b16 %v2406
    %v2503 = vunpack.c.l.b16 %v2407
    %v2504 = vunpack.c.l.b16 %v2408
    %v2505 = vunpack.c.l.b16 %v2409
    %v2506 = vunpack.c.l.b16 %v2410
    %v2507 = vunpack.c.l.b16 %v2411
    %v2508 = vunpack.c.l.b16 %v2412
    %v2509 = vunpack.c.l.b16 %v2413
    %v2510 = vunpack.c.l.b16 %v2414
    %v2511 = vunpack.c.l.b16 %v2415
    %v2512 = vunpack.c.l.b16 %v2416
    %v2513 = vunpack.c.l.b16 %v2417
    %v2514 = vunpack.c.l.b16 %v2418
    %v2515 = vunpack.c.l.b16 %v2419
    %v2516 = vunpack.c.l.b16 %v2420
    %v2517 = vunpack.c.l.b16 %v2421
    %v2518 = vunpack.c.l.b16 %v2422
    %v2519 = vunpack.c.l.b16 %v2423
    %v2520 = vunpack.c.l.b16 %v2424
    %v2521 = vunpack.c.l.b16 %v2425
    %v2522 = vunpack.c.l.b16 %v2426
    %v2523 = vunpack.c.l.b16 %v2427
    %v2524 = vunpack.c.l.b16 %v2428
    %v2525 = vunpack.c.l.b16 %v2429
    %v2526 = vpack.c.b16 %v2479, %v2478
    %v2527 = vpack.c.b16 %v2481, %v2480
    %v2528 = vpack.c.b16 %v2483, %v2482
    %v2529 = vpack.c.b16 %v2485, %v2484
    %v2530 = vpack.c.b16 %v2487, %v2486
    %v2531 = vpack.c.b16 %v2489, %v2488
    %v2532 = vpack.c.b16 %v2491, %v2490
    %v2533 = vpack.c.b16 %v2493, %v2492
    %v2534 = vpack.c.b16 %v2495, %v2494
    %v2535 = vpack.c.b16 %v2497, %v2496
    %v2536 = vpack.c.b16 %v2499, %v2498
    %v2537 = vpack.c.b16 %v2501, %v2500
    %v2538 = vpack.c.b16 %v2503, %v2502
    %v2539 = vpack.c.b16 %v2505, %v2504
    %v2540 = vpack.c.b16 %v2507, %v2506
    %v2541 = vpack.c.b16 %v2509, %v2508
    %v2542 = vpack.c.b16 %v2511, %v2510
    %v2543 = vpack.c.b16 %v2513, %v2512
    %v2544 = vpack.c.b16 %v2515, %v2514
    %v2545 = vpack.c.b16 %v2517, %v2516
    %v2546 = vpack.c.b16 %v2519, %v2518
    %v2547 = vpack.c.b16 %v2521, %v2520
    %v2548 = vpack.c.b16 %v2523, %v2522
    %v2549 = vpack.c.b16 %v2525, %v2524
    %2574 = vmatprep.subr.bf16.mxu0 0
    %2575 = vmatpush1.bf16.msra.mxu0 %v2526
    %2576 = vmatprep.subr.bf16.mxu0 0
    %2577 = vmatpush1.bf16.msra.mxu0 %v2527
    %2578 = vmatprep.subr.bf16.mxu0 0
    %2579 = vmatpush1.bf16.msra.mxu0 %v2528
    %2580 = vmatprep.subr.bf16.mxu0 0
    %2581 = vmatpush1.bf16.msra.mxu0 %v2529
    %2582 = vmatprep.subr.bf16.mxu0 0
    %2583 = vmatpush1.bf16.msra.mxu0 %v2530
    %2584 = vmatprep.subr.bf16.mxu0 0
    %2585 = vmatpush1.bf16.msra.mxu0 %v2531
    %2586 = vmatprep.subr.bf16.mxu0 0
    %2587 = vmatpush1.bf16.msra.mxu0 %v2532
    %2588 = vmatprep.subr.bf16.mxu0 0
    %2589 = vmatpush1.bf16.msra.mxu0 %v2533
    %2590 = vmatprep.subr.bf16.mxu0 0
    %2591 = vmatpush1.bf16.msra.mxu0 %v2534
    %2592 = vmatprep.subr.bf16.mxu0 0
    %2593 = vmatpush1.bf16.msra.mxu0 %v2535
    %2594 = vmatprep.subr.bf16.mxu0 0
    %2595 = vmatpush1.bf16.msra.mxu0 %v2536
    %2596 = vmatprep.subr.bf16.mxu0 0
    %2597 = vmatpush1.bf16.msra.mxu0 %v2537
    %2598 = vmatprep.subr.bf16.mxu0 0
    %2599 = vmatpush1.bf16.msra.mxu0 %v2538
    %2600 = vmatprep.subr.bf16.mxu0 0
    %2601 = vmatpush1.bf16.msra.mxu0 %v2539
    %2602 = vmatprep.subr.bf16.mxu0 0
    %2603 = vmatpush1.bf16.msra.mxu0 %v2540
    %2604 = vmatprep.subr.bf16.mxu0 0
    %2605 = vmatpush1.bf16.msra.mxu0 %v2541
    %2606 = vmatprep.mubr.bf16.mxu0 %v2331
    %2607 = vmatmul.mubr.bf16.gmra.mrb[0].mxu0 %v2330
    %v2608 = vpop.f32.mrb[0].mxu0
    %v2609 = vadd.f32 0.0, %v2608
    %v2610 = vpop.f32.mrb[0].mxu0
    %v2611 = vpop.f32.mrb[0].mxu0
    %v2612 = vpop.f32.mrb[0].mxu0
    %2613 = vdwg.mxu0
    %2614 = vmatprep.subr.bf16.mxu0 0
    %2615 = vmatpush1.bf16.msra.mxu0 %v2542
    %2616 = vmatprep.subr.bf16.mxu0 0
    %2617 = vmatpush1.bf16.msra.mxu0 %v2543
    %2618 = vmatprep.subr.bf16.mxu0 0
    %2619 = vmatpush1.bf16.msra.mxu0 %v2544
    %2620 = vmatprep.subr.bf16.mxu0 0
    %2621 = vmatpush1.bf16.msra.mxu0 %v2545
    %2622 = vmatprep.subr.bf16.mxu0 0
    %2623 = vmatpush1.bf16.msra.mxu0 %v2546
    %2624 = vmatprep.subr.bf16.mxu0 0
    %2625 = vmatpush1.bf16.msra.mxu0 %v2547
    %2626 = vmatprep.subr.bf16.mxu0 0
    %2627 = vmatpush1.bf16.msra.mxu0 %v2548
    %2628 = vmatprep.subr.bf16.mxu0 0
    %2629 = vmatpush1.bf16.msra.mxu0 %v2549
    %2630 = vmatprep.subr.bf16.mxu0 0
    %2631 = vmatpush1.bf16.msra.mxu0 0
    %2632 = vmatprep.subr.bf16.mxu0 0
    %2633 = vmatpush1.bf16.msra.mxu0 0
    %2634 = vmatprep.subr.bf16.mxu0 0
    %2635 = vmatpush1.bf16.msra.mxu0 0
    %2636 = vmatprep.subr.bf16.mxu0 0
    %2637 = vmatpush1.bf16.msra.mxu0 0
    %2638 = vmatprep.subr.bf16.mxu0 0
    %2639 = vmatpush1.bf16.msra.mxu0 0
    %2640 = vmatprep.subr.bf16.mxu0 0
    %2641 = vmatpush1.bf16.msra.mxu0 0
    %2642 = vmatprep.subr.bf16.mxu0 0
    %2643 = vmatpush1.bf16.msra.mxu0 0
    %2644 = vmatprep.subr.bf16.mxu0 0
    %2645 = vmatpush1.bf16.msra.mxu0 0
    %2646 = vmatprep.mubr.bf16.mxu0 0
    %2647 = vmatmul.mubr.bf16.gmra.mrb[0].mxu0 %v2332
    %v2648 = vpop.f32.mrb[0].mxu0
    %v2649 = vadd.f32 %v2609, %v2648
    %v2650 = vpop.f32.mrb[0].mxu0
    %v2651 = vpop.f32.mrb[0].mxu0
    %v2652 = vpop.f32.mrb[0].mxu0
    %2653 = vdwg.mxu0
    %v2702 = vunpack.c.l.b16 %v2333
    %v2703 = vunpack.c.l.b16 %v2334
    %v2704 = vunpack.c.l.b16 %v2335
    %v2705 = vunpack.c.l.b16 %v2336
    %v2706 = vunpack.c.l.b16 %v2337
    %v2707 = vunpack.c.l.b16 %v2338
    %v2708 = vunpack.c.l.b16 %v2339
    %v2709 = vunpack.c.l.b16 %v2340
    %v2710 = vunpack.c.l.b16 %v2341
    %v2711 = vunpack.c.l.b16 %v2342
    %v2712 = vunpack.c.l.b16 %v2343
    %v2713 = vunpack.c.l.b16 %v2344
    %v2714 = vunpack.c.l.b16 %v2345
    %v2715 = vunpack.c.l.b16 %v2346
    %v2716 = vunpack.c.l.b16 %v2347
    %v2717 = vunpack.c.l.b16 %v2348
    %v2718 = vunpack.c.l.b16 %v2349
    %v2719 = vunpack.c.l.b16 %v2350
    %v2720 = vunpack.c.l.b16 %v2351
    %v2721 = vunpack.c.l.b16 %v2352
    %v2722 = vunpack.c.l.b16 %v2353
    %v2723 = vunpack.c.l.b16 %v2354
    %v2724 = vunpack.c.l.b16 %v2355
    %v2725 = vunpack.c.l.b16 %v2356
    %v2726 = vunpack.c.l.b16 %v2357
    %v2727 = vunpack.c.l.b16 %v2358
    %v2728 = vunpack.c.l.b16 %v2359
    %v2729 = vunpack.c.l.b16 %v2360
    %v2730 = vunpack.c.l.b16 %v2361
    %v2731 = vunpack.c.l.b16 %v2362
    %v2732 = vunpack.c.l.b16 %v2363
    %v2733 = vunpack.c.l.b16 %v2364
    %v2734 = vunpack.c.l.b16 %v2365
    %v2735 = vunpack.c.l.b16 %v2366
    %v2736 = vunpack.c.l.b16 %v2367
    %v2737 = vunpack.c.l.b16 %v2368
    %v2738 = vunpack.c.l.b16 %v2369
    %v2739 = vunpack.c.l.b16 %v2370
    %v2740 = vunpack.c.l.b16 %v2371
    %v2741 = vunpack.c.l.b16 %v2372
    %v2742 = vunpack.c.l.b16 %v2373
    %v2743 = vunpack.c.l.b16 %v2374
    %v2744 = vunpack.c.l.b16 %v2375
    %v2745 = vunpack.c.l.b16 %v2376
    %v2746 = vunpack.c.l.b16 %v2377
    %v2747 = vunpack.c.l.b16 %v2378
    %v2748 = vunpack.c.l.b16 %v2379
    %v2749 = vunpack.c.l.b16 %v2380
    %v2750 = vpack.c.b16 %v2703, %v2702
    %v2751 = vpack.c.b16 %v2705, %v2704
    %v2752 = vpack.c.b16 %v2707, %v2706
    %v2753 = vpack.c.b16 %v2709, %v2708
    %v2754 = vpack.c.b16 %v2711, %v2710
    %v2755 = vpack.c.b16 %v2713, %v2712
    %v2756 = vpack.c.b16 %v2715, %v2714
    %v2757 = vpack.c.b16 %v2717, %v2716
    %v2758 = vpack.c.b16 %v2719, %v2718
    %v2759 = vpack.c.b16 %v2721, %v2720
    %v2760 = vpack.c.b16 %v2723, %v2722
    %v2761 = vpack.c.b16 %v2725, %v2724
    %v2762 = vpack.c.b16 %v2727, %v2726
    %v2763 = vpack.c.b16 %v2729, %v2728
    %v2764 = vpack.c.b16 %v2731, %v2730
    %v2765 = vpack.c.b16 %v2733, %v2732
    %v2766 = vpack.c.b16 %v2735, %v2734
    %v2767 = vpack.c.b16 %v2737, %v2736
    %v2768 = vpack.c.b16 %v2739, %v2738
    %v2769 = vpack.c.b16 %v2741, %v2740
    %v2770 = vpack.c.b16 %v2743, %v2742
    %v2771 = vpack.c.b16 %v2745, %v2744
    %v2772 = vpack.c.b16 %v2747, %v2746
    %v2773 = vpack.c.b16 %v2749, %v2748
    %2798 = vmatprep.subr.bf16.mxu0 0
    %2799 = vmatpush1.bf16.msra.mxu0 %v2750
    %2800 = vmatprep.subr.bf16.mxu0 0
    %2801 = vmatpush1.bf16.msra.mxu0 %v2751
    %2802 = vmatprep.subr.bf16.mxu0 0
    %2803 = vmatpush1.bf16.msra.mxu0 %v2752
    %2804 = vmatprep.subr.bf16.mxu0 0
    %2805 = vmatpush1.bf16.msra.mxu0 %v2753
    %2806 = vmatprep.subr.bf16.mxu0 0
    %2807 = vmatpush1.bf16.msra.mxu0 %v2754
    %2808 = vmatprep.subr.bf16.mxu0 0
    %2809 = vmatpush1.bf16.msra.mxu0 %v2755
    %2810 = vmatprep.subr.bf16.mxu0 0
    %2811 = vmatpush1.bf16.msra.mxu0 %v2756
    %2812 = vmatprep.subr.bf16.mxu0 0
    %2813 = vmatpush1.bf16.msra.mxu0 %v2757
    %2814 = vmatprep.subr.bf16.mxu0 0
    %2815 = vmatpush1.bf16.msra.mxu0 %v2758
    %2816 = vmatprep.subr.bf16.mxu0 0
    %2817 = vmatpush1.bf16.msra.mxu0 %v2759
    %2818 = vmatprep.subr.bf16.mxu0 0
    %2819 = vmatpush1.bf16.msra.mxu0 %v2760
    %2820 = vmatprep.subr.bf16.mxu0 0
    %2821 = vmatpush1.bf16.msra.mxu0 %v2761
    %2822 = vmatprep.subr.bf16.mxu0 0
    %2823 = vmatpush1.bf16.msra.mxu0 %v2762
    %2824 = vmatprep.subr.bf16.mxu0 0
    %2825 = vmatpush1.bf16.msra.mxu0 %v2763
    %2826 = vmatprep.subr.bf16.mxu0 0
    %2827 = vmatpush1.bf16.msra.mxu0 %v2764
    %2828 = vmatprep.subr.bf16.mxu0 0
    %2829 = vmatpush1.bf16.msra.mxu0 %v2765
    %2830 = vmatprep.mubr.bf16.mxu0 %v1505
    %2831 = vmatmul.mubr.bf16.gmra.mrb[0].mxu0 %v1504
    %v2832 = vpop.f32.mrb[0].mxu0
    %v2833 = vadd.f32 %v2649, %v2832
    %v2834 = vpop.f32.mrb[0].mxu0
    %v2835 = vpop.f32.mrb[0].mxu0
    %v2836 = vpop.f32.mrb[0].mxu0
    %2837 = vdwg.mxu0
    %2838 = vmatprep.subr.bf16.mxu0 0
    %2839 = vmatpush1.bf16.msra.mxu0 %v2766
    %2840 = vmatprep.subr.bf16.mxu0 0
    %2841 = vmatpush1.bf16.msra.mxu0 %v2767
    %2842 = vmatprep.subr.bf16.mxu0 0
    %2843 = vmatpush1.bf16.msra.mxu0 %v2768
    %2844 = vmatprep.subr.bf16.mxu0 0
    %2845 = vmatpush1.bf16.msra.mxu0 %v2769
    %2846 = vmatprep.subr.bf16.mxu0 0
    %2847 = vmatpush1.bf16.msra.mxu0 %v2770
    %2848 = vmatprep.subr.bf16.mxu0 0
    %2849 = vmatpush1.bf16.msra.mxu0 %v2771
    %2850 = vmatprep.subr.bf16.mxu0 0
    %2851 = vmatpush1.bf16.msra.mxu0 %v2772
    %2852 = vmatprep.subr.bf16.mxu0 0
    %2853 = vmatpush1.bf16.msra.mxu0 %v2773
    %2854 = vmatprep.subr.bf16.mxu0 0
    %2855 = vmatpush1.bf16.msra.mxu0 0
    %2856 = vmatprep.subr.bf16.mxu0 0
    %2857 = vmatpush1.bf16.msra.mxu0 0
    %2858 = vmatprep.subr.bf16.mxu0 0
    %2859 = vmatpush1.bf16.msra.mxu0 0
    %2860 = vmatprep.subr.bf16.mxu0 0
    %2861 = vmatpush1.bf16.msra.mxu0 0
    %2862 = vmatprep.subr.bf16.mxu0 0
    %2863 = vmatpush1.bf16.msra.mxu0 0
    %2864 = vmatprep.subr.bf16.mxu0 0
    %2865 = vmatpush1.bf16.msra.mxu0 0
    %2866 = vmatprep.subr.bf16.mxu0 0
    %2867 = vmatpush1.bf16.msra.mxu0 0
    %2868 = vmatprep.subr.bf16.mxu0 0
    %2869 = vmatpush1.bf16.msra.mxu0 0
    %2870 = vmatprep.mubr.bf16.mxu0 0
    %2871 = vmatmul.mubr.bf16.gmra.mrb[0].mxu0 %v1506
    %v2872 = vpop.f32.mrb[0].mxu0
    %v2873 = vadd.f32 %v2833, %v2872
    %v2874 = vpop.f32.mrb[0].mxu0
    %v2875 = vpop.f32.mrb[0].mxu0
    %v2876 = vpop.f32.mrb[0].mxu0
    %2877 = vdwg.mxu0
    %v2878 = vld [vmem:[%s4 + $0xe] sm:$0x1]
    %v2880 = vlaneseq
    %v2881 = vshrl.u32 %v2880, 7
    %v2882 = vsub.s32 0, %v2881
    %v2883 = vrot.slane %v2878, %v2882
    %v2885 = vadd.f32 %v2873, %v2883
    %2886 = vst [vmem:[#allocation10] sm:$0xff] %v2885
    // Predicated region
    $region38: #{tpu_custom_call.1} parent=1 // pred_check
      _
    $region39: #{tpu_custom_call.1} parent=1 // pred_check_branch
      %2888 = sbr.rel (0) target = $region41
    $region40: #{tpu_custom_call.1} parent=1 // pred_region
      %s2890 = ssub.s32 128, 128
      %2891 = vsyncadd [#allocation4], %s2890
      %s2893 = sshll.u32 [#allocation10], 4
      %s2894 = int_to_ptr.vmem [resolvable:$true] %s2893
      %2896 = dma.vmem_to_hbm [thread:$0]  %s2894, 128, %s5, [#allocation4]
    $region41: #{tpu_custom_call.1} parent=1 // pred_fallthru
      _
    // Predicated region
    $region42: #{tpu_custom_call.1} parent=1 // pred_check
      _
    $region43: #{tpu_custom_call.1} parent=1 // pred_check_branch
      %2898 = sbr.rel (0) target = $region45
    $region44: #{tpu_custom_call.1} parent=1 // pred_region
      %2899 = dma.done [#allocation4], 128
    $region45: #{tpu_custom_call.1} parent=1 // pred_fallthru
      _
    %2900 = vsyncpa [#allocation3], 1
    %2901 = vsyncpa [#allocation6], 1
    %2902 = vsyncpa [#allocation9], 1
    %2903 = vsyncpa [#allocation4], 1

</llo_original>
